<compile_context>
chip_gen: v7x
topology: tpu7x:2x2x1
jax: 0.10.0
libtpu: 0.0.40
codegen_flags: <defaults>
</compile_context>

<pallas_src>
import math
import functools

import jax
import jax.numpy as jnp
import numpy as np
from jax.experimental import pallas as pl
from jax.experimental.pallas import tpu as pltpu


def _mha_kernel(x_ref, wqkv_ref, wo_ref, rel_ref, rid_ref, o_ref, ctx_ref,
                *, n_heads, d_k, num_rel):
    L = x_ref.shape[1]
    D = x_ref.shape[2]

    x = x_ref[0]                                                    # (L, D) bf16
    # Fused Q/K/V projection: one lane-dense (L, D) @ (D, 3D) MXU matmul, f32 acc,
    # then ONE cast of the whole slab to bf16 (no f32 (L, 3D) value stays live).
    qkv = jnp.dot(x, wqkv_ref[...],
                  preferred_element_type=jnp.float32).astype(jnp.bfloat16)

    # int8 id stream -> int32 once; one-hot relation masks hoisted out of the
    # head loop (num_rel real relations + 1 sentinel "masked" id).
    rids = rid_ref[0].astype(jnp.int32)                             # (L, L)
    eq = [(rids == r).astype(jnp.float32) for r in range(num_rel + 1)]

    for h in range(n_heads):
        q_h = qkv[:, h * d_k:(h + 1) * d_k]                         # (L, dk) bf16
        k_h = qkv[:, D + h * d_k:D + (h + 1) * d_k]                 # (L, dk) bf16
        v_h = qkv[:, 2 * D + h * d_k:2 * D + (h + 1) * d_k]         # (L, dk) bf16

        # scores = q_h @ k_h^T  (softmax scale already folded into Wq in the glue)
        s = jax.lax.dot_general(q_h, k_h, (((1,), (1,)), ((), ())),
                                preferred_element_type=jnp.float32)  # (L, L) f32

        # Relation bias (+ attention-mask sentinel row with -1e30) gathered from
        # the SMEM (R+1, H) table as R+1 multiply-adds; no selects, no mask stream.
        for r in range(num_rel + 1):
            s = s + eq[r] * rel_ref[r, h]

        # Softmax over keys (f32) with DEFERRED normalization: PV matmul runs on
        # un-normalized p, then the 1/denom scale is applied to the (L, dk) result.
        m = jnp.max(s, axis=-1, keepdims=True)
        p = jnp.exp(s - m)
        denom = jnp.sum(p, axis=-1, keepdims=True)
        ctx_h = jnp.dot(p.astype(jnp.bfloat16), v_h,
                        preferred_element_type=jnp.float32)          # (L, dk) f32
        inv = pl.reciprocal(denom, approx=True)                      # EUP slot
        # dropout: identity in eval mode
        ctx_ref[:, h * d_k:(h + 1) * d_k] = (ctx_h * inv).astype(jnp.bfloat16)

    # Single lane-dense output projection over the concatenated bf16 head slab.
    o_ref[0] = jnp.dot(ctx_ref[...], wo_ref[...],
                       preferred_element_type=jnp.float32)


def relation_aware_mha(x, wq, wk, wv, wo, rel_emb_w, relation_ids, attn_mask,
                       n_heads):
    """x: (B, L, D); w*: (D, D) in `x @ W` layout; rel_emb_w: (R, H);
    relation_ids: (B, L, L) int; attn_mask: (B, L, L) bool (True = keep)."""
    B, L, D = x.shape
    dk = D // n_heads
    scale = 1.0 / math.sqrt(dk)
    num_rel = rel_emb_w.shape[0]

    # ---- glue (not the hot path) ----
    # Fold the softmax scale into wq; fuse Q/K/V into one (D, 3D) bf16 slab.
    wqkv = jnp.concatenate([wq * scale, wk, wv], axis=1).astype(jnp.bfloat16)
    wo_b = wo.astype(jnp.bfloat16)
    x_b = x.astype(jnp.bfloat16)

    # Relation table with a sentinel mask row appended: (R+1, H) f32 in SMEM.
    # Row `num_rel` holds -1e30 for every head (finite -> no NaN hazard).
    rel_f = jnp.concatenate(
        [rel_emb_w.astype(jnp.float32),
         jnp.full((1, n_heads), -1e30, dtype=jnp.float32)], axis=0)

    # Fold the boolean mask into the id stream (masked -> sentinel id) and ship
    # as int8 (num_rel << 127): one (B, L, L) byte stream instead of int32 ids
    # plus a separate f32 mask-bias stream.
    rids = jnp.where(attn_mask, relation_ids.astype(jnp.int32),
                     num_rel).astype(jnp.int8)

    kernel = functools.partial(_mha_kernel, n_heads=n_heads, d_k=dk,
                               num_rel=num_rel)

    return pl.pallas_call(
        kernel,
        out_shape=jax.ShapeDtypeStruct((B, L, D), jnp.float32),
        grid_spec=pltpu.PrefetchScalarGridSpec(
            num_scalar_prefetch=0,
            grid=(B,),
            in_specs=[
                pl.BlockSpec((1, L, D), lambda b: (b, 0, 0)),          # x (bf16)
                pl.BlockSpec((D, 3 * D), lambda b: (0, 0)),            # wqkv, VMEM-resident
                pl.BlockSpec((D, D), lambda b: (0, 0)),                # wo, VMEM-resident
                pl.BlockSpec(memory_space=pltpu.MemorySpace.SMEM),     # rel table (R+1, H)
                pl.BlockSpec((1, L, L), lambda b: (b, 0, 0)),          # relation ids int8
            ],
            out_specs=pl.BlockSpec((1, L, D), lambda b: (b, 0, 0)),
            scratch_shapes=[pltpu.VMEM((L, D), jnp.bfloat16)],         # bf16 head-ctx slab
        ),
        compiler_params=pltpu.CompilerParams(
            dimension_semantics=("parallel",),
            vmem_limit_bytes=48 * 1024 * 1024,
        ),
    )(x_b, wqkv, wo_b, rel_f, rids)


def ref_forward(x, wq, wk, wv, wo, rel_emb_w, relation_ids, attn_mask, n_heads):
    """Pure-JAX f32 reference mirroring the PyTorch forward (eval mode)."""
    B, L, D = x.shape
    dk = D // n_heads
    scale = 1.0 / math.sqrt(dk)
    q = (x @ wq).reshape(B, L, n_heads, dk).transpose(0, 2, 1, 3)
    k = (x @ wk).reshape(B, L, n_heads, dk).transpose(0, 2, 1, 3)
    v = (x @ wv).reshape(B, L, n_heads, dk).transpose(0, 2, 1, 3)
    scores = jnp.einsum("bhqd,bhkd->bhqk", q, k) * scale
    rel_bias = jnp.transpose(rel_emb_w[relation_ids], (0, 3, 1, 2))
    scores = scores + rel_bias
    scores = jnp.where(attn_mask[:, None, :, :], scores, -jnp.inf)
    attn = jax.nn.softmax(scores, axis=-1)
    out = jnp.einsum("bhqk,bhkd->bhqd", attn, v)
    out = out.transpose(0, 2, 1, 3).reshape(B, L, D)
    return out @ wo


def xavier_uniform(key, shape):
    fan_in, fan_out = shape
    limit = math.sqrt(6.0 / (fan_in + fan_out))
    return jax.random.uniform(key, shape, jnp.float32, -limit, limit)


if __name__ == "__main__":
    B, L, D, H, R = 2, 16, 32, 4, 8

    key = jax.random.PRNGKey(0)
    kx, kq, kk, kv, ko, kr, krel, kmask = jax.random.split(key, 8)

    x = jax.random.normal(kx, (B, L, D), jnp.float32)
    wq = xavier_uniform(kq, (D, D))
    wk = xavier_uniform(kk, (D, D))
    wv = xavier_uniform(kv, (D, D))
    wo = xavier_uniform(ko, (D, D))
    rel_emb_w = 0.02 * jax.random.normal(kr, (R, H), jnp.float32)

    relation_ids = jax.random.randint(krel, (B, L, L), 0, R, jnp.int32)
    attn_mask = jax.random.bernoulli(kmask, 0.7, (B, L, L))
    # keep diagonal unmasked so no row is fully masked (matches -inf reference exactly)
    attn_mask = attn_mask | jnp.eye(L, dtype=bool)[None]

    out = relation_aware_mha(x, wq, wk, wv, wo, rel_emb_w, relation_ids,
                             attn_mask, n_heads=H)
    out = jax.block_until_ready(out)

    ref = ref_forward(x, wq, wk, wv, wo, rel_emb_w, relation_ids, attn_mask, H)
    # bf16 MXU inputs -> loosened tolerance (accumulation & softmax stay f32).
    np.testing.assert_allclose(np.asarray(out), np.asarray(ref),
                               rtol=5e-2, atol=5e-2)
    print("KERNEL_OK")
</pallas_src>

<mosaic_0001>
module attributes {stable_mosaic.version = 11 : i64} {
  func.func @_mha_kernel(%arg0: i32, %arg1: memref<1x16x32xbf16, #tpu.memory_space<vmem>>, %arg2: memref<32x96xbf16, #tpu.memory_space<vmem>>, %arg3: memref<32x32xbf16, #tpu.memory_space<vmem>>, %arg4: memref<9x4xf32, #tpu.memory_space<smem>>, %arg5: memref<1x16x16xi8, #tpu.memory_space<vmem>>, %arg6: memref<1x16x32xf32, #tpu.memory_space<vmem>>, %arg7: memref<16x32xbf16, #tpu.memory_space<vmem>>) attributes {dimension_semantics = [#tpu.dimension_semantics<parallel>], iteration_bounds = array<i64: 2>, scalar_prefetch = 0 : i64, scratch_operands = 1 : i64, tpu.core_type = #tpu.core_type<tc>, window_params = [{transform_indices = @transform_0, window_bounds = array<i64: 1, 16, 32>}, {pipeline_mode = #tpu.pipeline_mode<synchronous>, transform_indices = @transform_1, window_bounds = array<i64: 32, 96>}, {pipeline_mode = #tpu.pipeline_mode<synchronous>, transform_indices = @transform_2, window_bounds = array<i64: 32, 32>}, {transform_indices = @transform_3, window_bounds = array<i64: 9, 4>}, {transform_indices = @transform_4, window_bounds = array<i64: 1, 16, 16>}, {transform_indices = @transform_5, window_bounds = array<i64: 1, 16, 32>}]} {
    %c0 = arith.constant 0 : index
    %c0_0 = arith.constant 0 : index
    %c0_1 = arith.constant 0 : index
    %0 = vector.load %arg1[%c0, %c0_0, %c0_1] : memref<1x16x32xbf16, #tpu.memory_space<vmem>>, vector<1x16x32xbf16>
    %1 = vector.shape_cast %0 : vector<1x16x32xbf16> to vector<16x32xbf16>
    %c0_2 = arith.constant 0 : index
    %c0_3 = arith.constant 0 : index
    %2 = vector.load %arg2[%c0_2, %c0_3] : memref<32x96xbf16, #tpu.memory_space<vmem>>, vector<32x96xbf16>
    %cst = arith.constant dense<0.000000e+00> : vector<16x96xf32>
    %3 = tpu.matmul %1, %2, %cst {dimension_numbers = #tpu.dot_dimension_numbers<[1], [0], [0], [1], [0, 0, 1, 1], [], []>} : vector<16x32xbf16>, vector<32x96xbf16>, vector<16x96xf32> -> vector<16x96xf32>
    %4 = arith.truncf %3 : vector<16x96xf32> to vector<16x96xbf16>
    %c0_4 = arith.constant 0 : index
    %c0_5 = arith.constant 0 : index
    %c0_6 = arith.constant 0 : index
    %5 = vector.load %arg5[%c0_4, %c0_5, %c0_6] : memref<1x16x16xi8, #tpu.memory_space<vmem>>, vector<1x16x16xi8>
    %6 = vector.shape_cast %5 : vector<1x16x16xi8> to vector<16x16xi8>
    %7 = arith.extsi %6 : vector<16x16xi8> to vector<16x16xi32>
    %c0_i32 = arith.constant 0 : i32
    %8 = vector.broadcast %c0_i32 : i32 to vector<16x16xi32>
    %9 = arith.cmpi eq, %7, %8 : vector<16x16xi32>
    %10 = arith.extui %9 : vector<16x16xi1> to vector<16x16xi32>
    %11 = arith.sitofp %10 : vector<16x16xi32> to vector<16x16xf32>
    %c1_i32 = arith.constant 1 : i32
    %12 = vector.broadcast %c1_i32 : i32 to vector<16x16xi32>
    %13 = arith.cmpi eq, %7, %12 : vector<16x16xi32>
    %14 = arith.extui %13 : vector<16x16xi1> to vector<16x16xi32>
    %15 = arith.sitofp %14 : vector<16x16xi32> to vector<16x16xf32>
    %c2_i32 = arith.constant 2 : i32
    %16 = vector.broadcast %c2_i32 : i32 to vector<16x16xi32>
    %17 = arith.cmpi eq, %7, %16 : vector<16x16xi32>
    %18 = arith.extui %17 : vector<16x16xi1> to vector<16x16xi32>
    %19 = arith.sitofp %18 : vector<16x16xi32> to vector<16x16xf32>
    %c3_i32 = arith.constant 3 : i32
    %20 = vector.broadcast %c3_i32 : i32 to vector<16x16xi32>
    %21 = arith.cmpi eq, %7, %20 : vector<16x16xi32>
    %22 = arith.extui %21 : vector<16x16xi1> to vector<16x16xi32>
    %23 = arith.sitofp %22 : vector<16x16xi32> to vector<16x16xf32>
    %c4_i32 = arith.constant 4 : i32
    %24 = vector.broadcast %c4_i32 : i32 to vector<16x16xi32>
    %25 = arith.cmpi eq, %7, %24 : vector<16x16xi32>
    %26 = arith.extui %25 : vector<16x16xi1> to vector<16x16xi32>
    %27 = arith.sitofp %26 : vector<16x16xi32> to vector<16x16xf32>
    %c5_i32 = arith.constant 5 : i32
    %28 = vector.broadcast %c5_i32 : i32 to vector<16x16xi32>
    %29 = arith.cmpi eq, %7, %28 : vector<16x16xi32>
    %30 = arith.extui %29 : vector<16x16xi1> to vector<16x16xi32>
    %31 = arith.sitofp %30 : vector<16x16xi32> to vector<16x16xf32>
    %c6_i32 = arith.constant 6 : i32
    %32 = vector.broadcast %c6_i32 : i32 to vector<16x16xi32>
    %33 = arith.cmpi eq, %7, %32 : vector<16x16xi32>
    %34 = arith.extui %33 : vector<16x16xi1> to vector<16x16xi32>
    %35 = arith.sitofp %34 : vector<16x16xi32> to vector<16x16xf32>
    %c7_i32 = arith.constant 7 : i32
    %36 = vector.broadcast %c7_i32 : i32 to vector<16x16xi32>
    %37 = arith.cmpi eq, %7, %36 : vector<16x16xi32>
    %38 = arith.extui %37 : vector<16x16xi1> to vector<16x16xi32>
    %39 = arith.sitofp %38 : vector<16x16xi32> to vector<16x16xf32>
    %c8_i32 = arith.constant 8 : i32
    %40 = vector.broadcast %c8_i32 : i32 to vector<16x16xi32>
    %41 = arith.cmpi eq, %7, %40 : vector<16x16xi32>
    %42 = arith.extui %41 : vector<16x16xi1> to vector<16x16xi32>
    %43 = arith.sitofp %42 : vector<16x16xi32> to vector<16x16xf32>
    %44 = vector.extract_strided_slice %4 {offsets = [0, 0], sizes = [16, 8], strides = [1, 1]} : vector<16x96xbf16> to vector<16x8xbf16>
    %45 = vector.extract_strided_slice %4 {offsets = [0, 32], sizes = [16, 8], strides = [1, 1]} : vector<16x96xbf16> to vector<16x8xbf16>
    %46 = vector.extract_strided_slice %4 {offsets = [0, 64], sizes = [16, 8], strides = [1, 1]} : vector<16x96xbf16> to vector<16x8xbf16>
    %cst_7 = arith.constant dense<0.000000e+00> : vector<16x16xf32>
    %47 = tpu.matmul %44, %45, %cst_7 {dimension_numbers = #tpu.dot_dimension_numbers<[1], [1], [0], [0], [0, 0, 1, 0], [], []>} : vector<16x8xbf16>, vector<16x8xbf16>, vector<16x16xf32> -> vector<16x16xf32>
    %c0_8 = arith.constant 0 : index
    %c0_9 = arith.constant 0 : index
    %48 = memref.load %arg4[%c0_8, %c0_9] : memref<9x4xf32, #tpu.memory_space<smem>>
    %49 = vector.broadcast %48 : f32 to vector<16x16xf32>
    %50 = arith.mulf %11, %49 : vector<16x16xf32>
    %51 = arith.addf %47, %50 : vector<16x16xf32>
    %c1 = arith.constant 1 : index
    %c0_10 = arith.constant 0 : index
    %52 = memref.load %arg4[%c1, %c0_10] : memref<9x4xf32, #tpu.memory_space<smem>>
    %53 = vector.broadcast %52 : f32 to vector<16x16xf32>
    %54 = arith.mulf %15, %53 : vector<16x16xf32>
    %55 = arith.addf %51, %54 : vector<16x16xf32>
    %c2 = arith.constant 2 : index
    %c0_11 = arith.constant 0 : index
    %56 = memref.load %arg4[%c2, %c0_11] : memref<9x4xf32, #tpu.memory_space<smem>>
    %57 = vector.broadcast %56 : f32 to vector<16x16xf32>
    %58 = arith.mulf %19, %57 : vector<16x16xf32>
    %59 = arith.addf %55, %58 : vector<16x16xf32>
    %c3 = arith.constant 3 : index
    %c0_12 = arith.constant 0 : index
    %60 = memref.load %arg4[%c3, %c0_12] : memref<9x4xf32, #tpu.memory_space<smem>>
    %61 = vector.broadcast %60 : f32 to vector<16x16xf32>
    %62 = arith.mulf %23, %61 : vector<16x16xf32>
    %63 = arith.addf %59, %62 : vector<16x16xf32>
    %c4 = arith.constant 4 : index
    %c0_13 = arith.constant 0 : index
    %64 = memref.load %arg4[%c4, %c0_13] : memref<9x4xf32, #tpu.memory_space<smem>>
    %65 = vector.broadcast %64 : f32 to vector<16x16xf32>
    %66 = arith.mulf %27, %65 : vector<16x16xf32>
    %67 = arith.addf %63, %66 : vector<16x16xf32>
    %c5 = arith.constant 5 : index
    %c0_14 = arith.constant 0 : index
    %68 = memref.load %arg4[%c5, %c0_14] : memref<9x4xf32, #tpu.memory_space<smem>>
    %69 = vector.broadcast %68 : f32 to vector<16x16xf32>
    %70 = arith.mulf %31, %69 : vector<16x16xf32>
    %71 = arith.addf %67, %70 : vector<16x16xf32>
    %c6 = arith.constant 6 : index
    %c0_15 = arith.constant 0 : index
    %72 = memref.load %arg4[%c6, %c0_15] : memref<9x4xf32, #tpu.memory_space<smem>>
    %73 = vector.broadcast %72 : f32 to vector<16x16xf32>
    %74 = arith.mulf %35, %73 : vector<16x16xf32>
    %75 = arith.addf %71, %74 : vector<16x16xf32>
    %c7 = arith.constant 7 : index
    %c0_16 = arith.constant 0 : index
    %76 = memref.load %arg4[%c7, %c0_16] : memref<9x4xf32, #tpu.memory_space<smem>>
    %77 = vector.broadcast %76 : f32 to vector<16x16xf32>
    %78 = arith.mulf %39, %77 : vector<16x16xf32>
    %79 = arith.addf %75, %78 : vector<16x16xf32>
    %c8 = arith.constant 8 : index
    %c0_17 = arith.constant 0 : index
    %80 = memref.load %arg4[%c8, %c0_17] : memref<9x4xf32, #tpu.memory_space<smem>>
    %81 = vector.broadcast %80 : f32 to vector<16x16xf32>
    %82 = arith.mulf %43, %81 : vector<16x16xf32>
    %83 = arith.addf %79, %82 : vector<16x16xf32>
    %cst_18 = arith.constant dense<0xFF800000> : vector<16xf32>
    %84 = vector.multi_reduction <maximumf>, %83, %cst_18 [1] : vector<16x16xf32> to vector<16xf32>
    %85 = vector.shape_cast %84 : vector<16xf32> to vector<16x1xf32>
    %86 = vector.broadcast %85 : vector<16x1xf32> to vector<16x16xf32>
    %87 = arith.subf %83, %86 : vector<16x16xf32>
    %88 = math.exp %87 : vector<16x16xf32>
    %cst_19 = arith.constant dense<0.000000e+00> : vector<16xf32>
    %89 = vector.multi_reduction <add>, %88, %cst_19 [1] : vector<16x16xf32> to vector<16xf32>
    %90 = vector.shape_cast %89 : vector<16xf32> to vector<16x1xf32>
    %91 = arith.truncf %88 : vector<16x16xf32> to vector<16x16xbf16>
    %cst_20 = arith.constant dense<0.000000e+00> : vector<16x8xf32>
    %92 = tpu.matmul %91, %46, %cst_20 {dimension_numbers = #tpu.dot_dimension_numbers<[1], [0], [0], [1], [0, 0, 1, 1], [], []>} : vector<16x16xbf16>, vector<16x8xbf16>, vector<16x8xf32> -> vector<16x8xf32>
    %93 = tpu.reciprocal %90 {approx = true} : vector<16x1xf32> -> vector<16x1xf32>
    %94 = vector.broadcast %93 : vector<16x1xf32> to vector<16x8xf32>
    %95 = arith.mulf %92, %94 : vector<16x8xf32>
    %96 = arith.truncf %95 : vector<16x8xf32> to vector<16x8xbf16>
    %c0_21 = arith.constant 0 : index
    %c0_22 = arith.constant 0 : index
    %97 = vector.load %arg7[%c0_21, %c0_22] : memref<16x32xbf16, #tpu.memory_space<vmem>>, vector<16x8xbf16>
    tpu.vector_store %arg7[%c0_21, %c0_22], %96 {strides = array<i32>} : memref<16x32xbf16, #tpu.memory_space<vmem>>, vector<16x8xbf16>,
    %98 = vector.extract_strided_slice %4 {offsets = [0, 8], sizes = [16, 8], strides = [1, 1]} : vector<16x96xbf16> to vector<16x8xbf16>
    %99 = vector.extract_strided_slice %4 {offsets = [0, 40], sizes = [16, 8], strides = [1, 1]} : vector<16x96xbf16> to vector<16x8xbf16>
    %100 = vector.extract_strided_slice %4 {offsets = [0, 72], sizes = [16, 8], strides = [1, 1]} : vector<16x96xbf16> to vector<16x8xbf16>
    %cst_23 = arith.constant dense<0.000000e+00> : vector<16x16xf32>
    %101 = tpu.matmul %98, %99, %cst_23 {dimension_numbers = #tpu.dot_dimension_numbers<[1], [1], [0], [0], [0, 0, 1, 0], [], []>} : vector<16x8xbf16>, vector<16x8xbf16>, vector<16x16xf32> -> vector<16x16xf32>
    %c0_24 = arith.constant 0 : index
    %c1_25 = arith.constant 1 : index
    %102 = memref.load %arg4[%c0_24, %c1_25] : memref<9x4xf32, #tpu.memory_space<smem>>
    %103 = vector.broadcast %102 : f32 to vector<16x16xf32>
    %104 = arith.mulf %11, %103 : vector<16x16xf32>
    %105 = arith.addf %101, %104 : vector<16x16xf32>
    %c1_26 = arith.constant 1 : index
    %c1_27 = arith.constant 1 : index
    %106 = memref.load %arg4[%c1_26, %c1_27] : memref<9x4xf32, #tpu.memory_space<smem>>
    %107 = vector.broadcast %106 : f32 to vector<16x16xf32>
    %108 = arith.mulf %15, %107 : vector<16x16xf32>
    %109 = arith.addf %105, %108 : vector<16x16xf32>
    %c2_28 = arith.constant 2 : index
    %c1_29 = arith.constant 1 : index
    %110 = memref.load %arg4[%c2_28, %c1_29] : memref<9x4xf32, #tpu.memory_space<smem>>
    %111 = vector.broadcast %110 : f32 to vector<16x16xf32>
    %112 = arith.mulf %19, %111 : vector<16x16xf32>
    %113 = arith.addf %109, %112 : vector<16x16xf32>
    %c3_30 = arith.constant 3 : index
    %c1_31 = arith.constant 1 : index
    %114 = memref.load %arg4[%c3_30, %c1_31] : memref<9x4xf32, #tpu.memory_space<smem>>
    %115 = vector.broadcast %114 : f32 to vector<16x16xf32>
    %116 = arith.mulf %23, %115 : vector<16x16xf32>
    %117 = arith.addf %113, %116 : vector<16x16xf32>
    %c4_32 = arith.constant 4 : index
    %c1_33 = arith.constant 1 : index
    %118 = memref.load %arg4[%c4_32, %c1_33] : memref<9x4xf32, #tpu.memory_space<smem>>
    %119 = vector.broadcast %118 : f32 to vector<16x16xf32>
    %120 = arith.mulf %27, %119 : vector<16x16xf32>
    %121 = arith.addf %117, %120 : vector<16x16xf32>
    %c5_34 = arith.constant 5 : index
    %c1_35 = arith.constant 1 : index
    %122 = memref.load %arg4[%c5_34, %c1_35] : memref<9x4xf32, #tpu.memory_space<smem>>
    %123 = vector.broadcast %122 : f32 to vector<16x16xf32>
    %124 = arith.mulf %31, %123 : vector<16x16xf32>
    %125 = arith.addf %121, %124 : vector<16x16xf32>
    %c6_36 = arith.constant 6 : index
    %c1_37 = arith.constant 1 : index
    %126 = memref.load %arg4[%c6_36, %c1_37] : memref<9x4xf32, #tpu.memory_space<smem>>
    %127 = vector.broadcast %126 : f32 to vector<16x16xf32>
    %128 = arith.mulf %35, %127 : vector<16x16xf32>
    %129 = arith.addf %125, %128 : vector<16x16xf32>
    %c7_38 = arith.constant 7 : index
    %c1_39 = arith.constant 1 : index
    %130 = memref.load %arg4[%c7_38, %c1_39] : memref<9x4xf32, #tpu.memory_space<smem>>
    %131 = vector.broadcast %130 : f32 to vector<16x16xf32>
    %132 = arith.mulf %39, %131 : vector<16x16xf32>
    %133 = arith.addf %129, %132 : vector<16x16xf32>
    %c8_40 = arith.constant 8 : index
    %c1_41 = arith.constant 1 : index
    %134 = memref.load %arg4[%c8_40, %c1_41] : memref<9x4xf32, #tpu.memory_space<smem>>
    %135 = vector.broadcast %134 : f32 to vector<16x16xf32>
    %136 = arith.mulf %43, %135 : vector<16x16xf32>
    %137 = arith.addf %133, %136 : vector<16x16xf32>
    %cst_42 = arith.constant dense<0xFF800000> : vector<16xf32>
    %138 = vector.multi_reduction <maximumf>, %137, %cst_42 [1] : vector<16x16xf32> to vector<16xf32>
    %139 = vector.shape_cast %138 : vector<16xf32> to vector<16x1xf32>
    %140 = vector.broadcast %139 : vector<16x1xf32> to vector<16x16xf32>
    %141 = arith.subf %137, %140 : vector<16x16xf32>
    %142 = math.exp %141 : vector<16x16xf32>
    %cst_43 = arith.constant dense<0.000000e+00> : vector<16xf32>
    %143 = vector.multi_reduction <add>, %142, %cst_43 [1] : vector<16x16xf32> to vector<16xf32>
    %144 = vector.shape_cast %143 : vector<16xf32> to vector<16x1xf32>
    %145 = arith.truncf %142 : vector<16x16xf32> to vector<16x16xbf16>
    %cst_44 = arith.constant dense<0.000000e+00> : vector<16x8xf32>
    %146 = tpu.matmul %145, %100, %cst_44 {dimension_numbers = #tpu.dot_dimension_numbers<[1], [0], [0], [1], [0, 0, 1, 1], [], []>} : vector<16x16xbf16>, vector<16x8xbf16>, vector<16x8xf32> -> vector<16x8xf32>
    %147 = tpu.reciprocal %144 {approx = true} : vector<16x1xf32> -> vector<16x1xf32>
    %148 = vector.broadcast %147 : vector<16x1xf32> to vector<16x8xf32>
    %149 = arith.mulf %146, %148 : vector<16x8xf32>
    %150 = arith.truncf %149 : vector<16x8xf32> to vector<16x8xbf16>
    %c0_45 = arith.constant 0 : index
    %c8_46 = arith.constant 8 : index
    %151 = vector.load %arg7[%c0_45, %c8_46] : memref<16x32xbf16, #tpu.memory_space<vmem>>, vector<16x8xbf16>
    tpu.vector_store %arg7[%c0_45, %c8_46], %150 {strides = array<i32>} : memref<16x32xbf16, #tpu.memory_space<vmem>>, vector<16x8xbf16>,
    %152 = vector.extract_strided_slice %4 {offsets = [0, 16], sizes = [16, 8], strides = [1, 1]} : vector<16x96xbf16> to vector<16x8xbf16>
    %153 = vector.extract_strided_slice %4 {offsets = [0, 48], sizes = [16, 8], strides = [1, 1]} : vector<16x96xbf16> to vector<16x8xbf16>
    %154 = vector.extract_strided_slice %4 {offsets = [0, 80], sizes = [16, 8], strides = [1, 1]} : vector<16x96xbf16> to vector<16x8xbf16>
    %cst_47 = arith.constant dense<0.000000e+00> : vector<16x16xf32>
    %155 = tpu.matmul %152, %153, %cst_47 {dimension_numbers = #tpu.dot_dimension_numbers<[1], [1], [0], [0], [0, 0, 1, 0], [], []>} : vector<16x8xbf16>, vector<16x8xbf16>, vector<16x16xf32> -> vector<16x16xf32>
    %c0_48 = arith.constant 0 : index
    %c2_49 = arith.constant 2 : index
    %156 = memref.load %arg4[%c0_48, %c2_49] : memref<9x4xf32, #tpu.memory_space<smem>>
    %157 = vector.broadcast %156 : f32 to vector<16x16xf32>
    %158 = arith.mulf %11, %157 : vector<16x16xf32>
    %159 = arith.addf %155, %158 : vector<16x16xf32>
    %c1_50 = arith.constant 1 : index
    %c2_51 = arith.constant 2 : index
    %160 = memref.load %arg4[%c1_50, %c2_51] : memref<9x4xf32, #tpu.memory_space<smem>>
    %161 = vector.broadcast %160 : f32 to vector<16x16xf32>
    %162 = arith.mulf %15, %161 : vector<16x16xf32>
    %163 = arith.addf %159, %162 : vector<16x16xf32>
    %c2_52 = arith.constant 2 : index
    %c2_53 = arith.constant 2 : index
    %164 = memref.load %arg4[%c2_52, %c2_53] : memref<9x4xf32, #tpu.memory_space<smem>>
    %165 = vector.broadcast %164 : f32 to vector<16x16xf32>
    %166 = arith.mulf %19, %165 : vector<16x16xf32>
    %167 = arith.addf %163, %166 : vector<16x16xf32>
    %c3_54 = arith.constant 3 : index
    %c2_55 = arith.constant 2 : index
    %168 = memref.load %arg4[%c3_54, %c2_55] : memref<9x4xf32, #tpu.memory_space<smem>>
    %169 = vector.broadcast %168 : f32 to vector<16x16xf32>
    %170 = arith.mulf %23, %169 : vector<16x16xf32>
    %171 = arith.addf %167, %170 : vector<16x16xf32>
    %c4_56 = arith.constant 4 : index
    %c2_57 = arith.constant 2 : index
    %172 = memref.load %arg4[%c4_56, %c2_57] : memref<9x4xf32, #tpu.memory_space<smem>>
    %173 = vector.broadcast %172 : f32 to vector<16x16xf32>
    %174 = arith.mulf %27, %173 : vector<16x16xf32>
    %175 = arith.addf %171, %174 : vector<16x16xf32>
    %c5_58 = arith.constant 5 : index
    %c2_59 = arith.constant 2 : index
    %176 = memref.load %arg4[%c5_58, %c2_59] : memref<9x4xf32, #tpu.memory_space<smem>>
    %177 = vector.broadcast %176 : f32 to vector<16x16xf32>
    %178 = arith.mulf %31, %177 : vector<16x16xf32>
    %179 = arith.addf %175, %178 : vector<16x16xf32>
    %c6_60 = arith.constant 6 : index
    %c2_61 = arith.constant 2 : index
    %180 = memref.load %arg4[%c6_60, %c2_61] : memref<9x4xf32, #tpu.memory_space<smem>>
    %181 = vector.broadcast %180 : f32 to vector<16x16xf32>
    %182 = arith.mulf %35, %181 : vector<16x16xf32>
    %183 = arith.addf %179, %182 : vector<16x16xf32>
    %c7_62 = arith.constant 7 : index
    %c2_63 = arith.constant 2 : index
    %184 = memref.load %arg4[%c7_62, %c2_63] : memref<9x4xf32, #tpu.memory_space<smem>>
    %185 = vector.broadcast %184 : f32 to vector<16x16xf32>
    %186 = arith.mulf %39, %185 : vector<16x16xf32>
    %187 = arith.addf %183, %186 : vector<16x16xf32>
    %c8_64 = arith.constant 8 : index
    %c2_65 = arith.constant 2 : index
    %188 = memref.load %arg4[%c8_64, %c2_65] : memref<9x4xf32, #tpu.memory_space<smem>>
    %189 = vector.broadcast %188 : f32 to vector<16x16xf32>
    %190 = arith.mulf %43, %189 : vector<16x16xf32>
    %191 = arith.addf %187, %190 : vector<16x16xf32>
    %cst_66 = arith.constant dense<0xFF800000> : vector<16xf32>
    %192 = vector.multi_reduction <maximumf>, %191, %cst_66 [1] : vector<16x16xf32> to vector<16xf32>
    %193 = vector.shape_cast %192 : vector<16xf32> to vector<16x1xf32>
    %194 = vector.broadcast %193 : vector<16x1xf32> to vector<16x16xf32>
    %195 = arith.subf %191, %194 : vector<16x16xf32>
    %196 = math.exp %195 : vector<16x16xf32>
    %cst_67 = arith.constant dense<0.000000e+00> : vector<16xf32>
    %197 = vector.multi_reduction <add>, %196, %cst_67 [1] : vector<16x16xf32> to vector<16xf32>
    %198 = vector.shape_cast %197 : vector<16xf32> to vector<16x1xf32>
    %199 = arith.truncf %196 : vector<16x16xf32> to vector<16x16xbf16>
    %cst_68 = arith.constant dense<0.000000e+00> : vector<16x8xf32>
    %200 = tpu.matmul %199, %154, %cst_68 {dimension_numbers = #tpu.dot_dimension_numbers<[1], [0], [0], [1], [0, 0, 1, 1], [], []>} : vector<16x16xbf16>, vector<16x8xbf16>, vector<16x8xf32> -> vector<16x8xf32>
    %201 = tpu.reciprocal %198 {approx = true} : vector<16x1xf32> -> vector<16x1xf32>
    %202 = vector.broadcast %201 : vector<16x1xf32> to vector<16x8xf32>
    %203 = arith.mulf %200, %202 : vector<16x8xf32>
    %204 = arith.truncf %203 : vector<16x8xf32> to vector<16x8xbf16>
    %c0_69 = arith.constant 0 : index
    %c16 = arith.constant 16 : index
    %205 = vector.load %arg7[%c0_69, %c16] : memref<16x32xbf16, #tpu.memory_space<vmem>>, vector<16x8xbf16>
    tpu.vector_store %arg7[%c0_69, %c16], %204 {strides = array<i32>} : memref<16x32xbf16, #tpu.memory_space<vmem>>, vector<16x8xbf16>,
    %206 = vector.extract_strided_slice %4 {offsets = [0, 24], sizes = [16, 8], strides = [1, 1]} : vector<16x96xbf16> to vector<16x8xbf16>
    %207 = vector.extract_strided_slice %4 {offsets = [0, 56], sizes = [16, 8], strides = [1, 1]} : vector<16x96xbf16> to vector<16x8xbf16>
    %208 = vector.extract_strided_slice %4 {offsets = [0, 88], sizes = [16, 8], strides = [1, 1]} : vector<16x96xbf16> to vector<16x8xbf16>
    %cst_70 = arith.constant dense<0.000000e+00> : vector<16x16xf32>
    %209 = tpu.matmul %206, %207, %cst_70 {dimension_numbers = #tpu.dot_dimension_numbers<[1], [1], [0], [0], [0, 0, 1, 0], [], []>} : vector<16x8xbf16>, vector<16x8xbf16>, vector<16x16xf32> -> vector<16x16xf32>
    %c0_71 = arith.constant 0 : index
    %c3_72 = arith.constant 3 : index
    %210 = memref.load %arg4[%c0_71, %c3_72] : memref<9x4xf32, #tpu.memory_space<smem>>
    %211 = vector.broadcast %210 : f32 to vector<16x16xf32>
    %212 = arith.mulf %11, %211 : vector<16x16xf32>
    %213 = arith.addf %209, %212 : vector<16x16xf32>
    %c1_73 = arith.constant 1 : index
    %c3_74 = arith.constant 3 : index
    %214 = memref.load %arg4[%c1_73, %c3_74] : memref<9x4xf32, #tpu.memory_space<smem>>
    %215 = vector.broadcast %214 : f32 to vector<16x16xf32>
    %216 = arith.mulf %15, %215 : vector<16x16xf32>
    %217 = arith.addf %213, %216 : vector<16x16xf32>
    %c2_75 = arith.constant 2 : index
    %c3_76 = arith.constant 3 : index
    %218 = memref.load %arg4[%c2_75, %c3_76] : memref<9x4xf32, #tpu.memory_space<smem>>
    %219 = vector.broadcast %218 : f32 to vector<16x16xf32>
    %220 = arith.mulf %19, %219 : vector<16x16xf32>
    %221 = arith.addf %217, %220 : vector<16x16xf32>
    %c3_77 = arith.constant 3 : index
    %c3_78 = arith.constant 3 : index
    %222 = memref.load %arg4[%c3_77, %c3_78] : memref<9x4xf32, #tpu.memory_space<smem>>
    %223 = vector.broadcast %222 : f32 to vector<16x16xf32>
    %224 = arith.mulf %23, %223 : vector<16x16xf32>
    %225 = arith.addf %221, %224 : vector<16x16xf32>
    %c4_79 = arith.constant 4 : index
    %c3_80 = arith.constant 3 : index
    %226 = memref.load %arg4[%c4_79, %c3_80] : memref<9x4xf32, #tpu.memory_space<smem>>
    %227 = vector.broadcast %226 : f32 to vector<16x16xf32>
    %228 = arith.mulf %27, %227 : vector<16x16xf32>
    %229 = arith.addf %225, %228 : vector<16x16xf32>
    %c5_81 = arith.constant 5 : index
    %c3_82 = arith.constant 3 : index
    %230 = memref.load %arg4[%c5_81, %c3_82] : memref<9x4xf32, #tpu.memory_space<smem>>
    %231 = vector.broadcast %230 : f32 to vector<16x16xf32>
    %232 = arith.mulf %31, %231 : vector<16x16xf32>
    %233 = arith.addf %229, %232 : vector<16x16xf32>
    %c6_83 = arith.constant 6 : index
    %c3_84 = arith.constant 3 : index
    %234 = memref.load %arg4[%c6_83, %c3_84] : memref<9x4xf32, #tpu.memory_space<smem>>
    %235 = vector.broadcast %234 : f32 to vector<16x16xf32>
    %236 = arith.mulf %35, %235 : vector<16x16xf32>
    %237 = arith.addf %233, %236 : vector<16x16xf32>
    %c7_85 = arith.constant 7 : index
    %c3_86 = arith.constant 3 : index
    %238 = memref.load %arg4[%c7_85, %c3_86] : memref<9x4xf32, #tpu.memory_space<smem>>
    %239 = vector.broadcast %238 : f32 to vector<16x16xf32>
    %240 = arith.mulf %39, %239 : vector<16x16xf32>
    %241 = arith.addf %237, %240 : vector<16x16xf32>
    %c8_87 = arith.constant 8 : index
    %c3_88 = arith.constant 3 : index
    %242 = memref.load %arg4[%c8_87, %c3_88] : memref<9x4xf32, #tpu.memory_space<smem>>
    %243 = vector.broadcast %242 : f32 to vector<16x16xf32>
    %244 = arith.mulf %43, %243 : vector<16x16xf32>
    %245 = arith.addf %241, %244 : vector<16x16xf32>
    %cst_89 = arith.constant dense<0xFF800000> : vector<16xf32>
    %246 = vector.multi_reduction <maximumf>, %245, %cst_89 [1] : vector<16x16xf32> to vector<16xf32>
    %247 = vector.shape_cast %246 : vector<16xf32> to vector<16x1xf32>
    %248 = vector.broadcast %247 : vector<16x1xf32> to vector<16x16xf32>
    %249 = arith.subf %245, %248 : vector<16x16xf32>
    %250 = math.exp %249 : vector<16x16xf32>
    %cst_90 = arith.constant dense<0.000000e+00> : vector<16xf32>
    %251 = vector.multi_reduction <add>, %250, %cst_90 [1] : vector<16x16xf32> to vector<16xf32>
    %252 = vector.shape_cast %251 : vector<16xf32> to vector<16x1xf32>
    %253 = arith.truncf %250 : vector<16x16xf32> to vector<16x16xbf16>
    %cst_91 = arith.constant dense<0.000000e+00> : vector<16x8xf32>
    %254 = tpu.matmul %253, %208, %cst_91 {dimension_numbers = #tpu.dot_dimension_numbers<[1], [0], [0], [1], [0, 0, 1, 1], [], []>} : vector<16x16xbf16>, vector<16x8xbf16>, vector<16x8xf32> -> vector<16x8xf32>
    %255 = tpu.reciprocal %252 {approx = true} : vector<16x1xf32> -> vector<16x1xf32>
    %256 = vector.broadcast %255 : vector<16x1xf32> to vector<16x8xf32>
    %257 = arith.mulf %254, %256 : vector<16x8xf32>
    %258 = arith.truncf %257 : vector<16x8xf32> to vector<16x8xbf16>
    %c0_92 = arith.constant 0 : index
    %c24 = arith.constant 24 : index
    %259 = vector.load %arg7[%c0_92, %c24] : memref<16x32xbf16, #tpu.memory_space<vmem>>, vector<16x8xbf16>
    tpu.vector_store %arg7[%c0_92, %c24], %258 {strides = array<i32>} : memref<16x32xbf16, #tpu.memory_space<vmem>>, vector<16x8xbf16>,
    %c0_93 = arith.constant 0 : index
    %c0_94 = arith.constant 0 : index
    %260 = vector.load %arg7[%c0_93, %c0_94] : memref<16x32xbf16, #tpu.memory_space<vmem>>, vector<16x32xbf16>
    %c0_95 = arith.constant 0 : index
    %c0_96 = arith.constant 0 : index
    %261 = vector.load %arg3[%c0_95, %c0_96] : memref<32x32xbf16, #tpu.memory_space<vmem>>, vector<32x32xbf16>
    %cst_97 = arith.constant dense<0.000000e+00> : vector<16x32xf32>
    %262 = tpu.matmul %260, %261, %cst_97 {dimension_numbers = #tpu.dot_dimension_numbers<[1], [0], [0], [1], [0, 0, 1, 1], [], []>} : vector<16x32xbf16>, vector<32x32xbf16>, vector<16x32xf32> -> vector<16x32xf32>
    %c0_98 = arith.constant 0 : index
    %c0_99 = arith.constant 0 : index
    %c0_100 = arith.constant 0 : index
    %263 = vector.load %arg6[%c0_98, %c0_99, %c0_100] : memref<1x16x32xf32, #tpu.memory_space<vmem>>, vector<1x16x32xf32>
    %264 = vector.shape_cast %263 : vector<1x16x32xf32> to vector<16x32xf32>
    %265 = vector.shape_cast %262 : vector<16x32xf32> to vector<1x16x32xf32>
    tpu.vector_store %arg6[%c0_98, %c0_99, %c0_100], %265 {strides = array<i32>} : memref<1x16x32xf32, #tpu.memory_space<vmem>>, vector<1x16x32xf32>,
    return
  }
  func.func @transform_0(%arg0: i32) -> (i32, i32, i32) {
    %c0_i32 = arith.constant 0 : i32
    %c0_i32_0 = arith.constant 0 : i32
    %c0_i32_1 = arith.constant 0 : i32
    return %arg0, %c0_i32, %c0_i32_0 : i32, i32, i32
  }
  func.func @transform_1(%arg0: i32) -> (i32, i32) {
    %c0_i32 = arith.constant 0 : i32
    %c0_i32_0 = arith.constant 0 : i32
    %c0_i32_1 = arith.constant 0 : i32
    return %c0_i32, %c0_i32_0 : i32, i32
  }
  func.func @transform_2(%arg0: i32) -> (i32, i32) {
    %c0_i32 = arith.constant 0 : i32
    %c0_i32_0 = arith.constant 0 : i32
    %c0_i32_1 = arith.constant 0 : i32
    return %c0_i32, %c0_i32_0 : i32, i32
  }
  func.func @transform_3(%arg0: i32) -> (i32, i32) {
    %c0_i32 = arith.constant 0 : i32
    %c0_i32_0 = arith.constant 0 : i32
    %c0_i32_1 = arith.constant 0 : i32
    return %c0_i32, %c0_i32_0 : i32, i32
  }
  func.func @transform_4(%arg0: i32) -> (i32, i32, i32) {
    %c0_i32 = arith.constant 0 : i32
    %c0_i32_0 = arith.constant 0 : i32
    %c0_i32_1 = arith.constant 0 : i32
    return %arg0, %c0_i32, %c0_i32_0 : i32, i32, i32
  }
  func.func @transform_5(%arg0: i32) -> (i32, i32, i32) {
    %c0_i32 = arith.constant 0 : i32
    %c0_i32_0 = arith.constant 0 : i32
    %c0_i32_1 = arith.constant 0 : i32
    return %arg0, %c0_i32, %c0_i32_0 : i32, i32, i32
  }
}

</mosaic_0001>

<llo_original>
// kernel: tpu_custom_call.1
$region0: #{tpu_custom_call.1}
  #allocation0 [shape = 'u32[]', space=smem, size = 0x4, offset = 0x4, fixed_abs, tag = 'smem constant byte address 0x4 - core index']
  #allocation1 [shape = 'u32[144,128]{1,0:T(1,128)}', space=vmem, size = 0x12000, scoped, tag = 'internal scratch']
  #allocation2 [shape = 'bf16[16,32]{1,0:T(16,128)(2,1)}', space=vmem, size = 0x1000, scoped, tag = 'scratch operand']
  %s0 = inlined_call_operand.vmem [shape: bf16[2,16,32], index: 0, kind: input, shape index: {}]
  %s1 = inlined_call_operand.hbm [shape: bf16[32,96], index: 1, kind: input, shape index: {}]
  %s2 = inlined_call_operand.hbm [shape: bf16[32,32], index: 2, kind: input, shape index: {}]
  %s3 = inlined_call_operand.vmem [shape: f32[9,4], index: 3, kind: input, shape index: {}]
  %s4 = inlined_call_operand.vmem [shape: s8[2,16,16], index: 4, kind: input, shape index: {}]
  %s5 = inlined_call_operand.hbm [shape: f32[2,16,32], index: 5, kind: output, shape index: {}]
  %s6 = sld [smem:[#allocation0]]
  $region65: #{tpu_custom_call.1} parent=0
    _
  %s8 = ssub.s32 1, %s6
  %s9 = scalar_select 0, %s8, %s6
  $region1: #{tpu_custom_call.1} parent=0
    #allocation3 [shape = 'u8[8192]{0}', space=vmem, size = 0x2000, scoped, tag = 'input window, operand 1, single buffered']
    #allocation4 [shape = 's32[2]{0}', space=sflag, size = 0x8, scoped, tag = 'scoped memory for tpu_custom_call.1']
    #allocation5 [shape = 's32[2]{0}', space=sflag, size = 0x8, scoped, tag = 'scoped memory for tpu_custom_call.1']
    #allocation6 [shape = 's32[2]{0}', space=sflag, size = 0x8, scoped, tag = 'scoped memory for tpu_custom_call.1']
    #allocation7 [shape = 'u8[8192]{0}', space=vmem, size = 0x2000, scoped, tag = 'input window, operand 2, single buffered']
    #allocation8 [shape = 's32[1]{0}', space=sflag, size = 0x4, scoped, tag = 'scoped memory for tpu_custom_call.1']
    #allocation9 [shape = 'u8[8192]{0}', space=smem, size = 0x2000, scoped, tag = 'input window, operand 3, single buffered']
    #allocation10 [shape = 'u8[16384]{0}', space=vmem, size = 0x4000, scoped, tag = 'output window, operand 0']
    %10 = vsyncpa [#allocation4], 0
    %11 = vsyncpa [#allocation8], 0
    %12 = vsyncpa [#allocation6], 0
    %13 = vsyncpa [#allocation5], 0
    %s14 = scalar_lea.sflag [#allocation5], 1
    %15 = vsyncpa %s14, 0
    loop: start=0, step=1, limit=4
    $region2: #{tpu_custom_call.1} parent=1 // loop_pre_header
      _
    $region3: #{tpu_custom_call.1} parent=1 // loop_header
      %s17 = sphi 0, %s21
      %p18 = scmp.ge.s32.totalorder %s17, 4
      %s27 = sphi 0, %s29
      %s30 = sphi 0, %s27
      %s31 = sphi 0, %s30
      %s47 = sphi 0, %s31
      %s51 = sphi 0, %s51
      %s53 = sphi 0, %s51
      %s54 = sphi 0, %s53
      %s68 = sphi 0, %s54
      %s72 = sphi 0, %s72
      %s74 = sphi 0, %s72
      %s75 = sphi 0, %s74
      %s89 = sphi 0, %s75
      %s93 = sphi 0, %s93
      %s95 = sphi 0, %s93
      %s96 = sphi 0, %s95
      %s110 = sphi 0, %s96
      %s116 = sphi 0, %s118
      %s119 = sphi 0, %s116
      %s120 = sphi 0, %s119
      %s136 = sphi 0, %s120
      %s142 = sphi 0, %s144
      %s145 = sphi 0, %s142
      %s146 = sphi 0, %s145
      %s162 = sphi 0, %s146
    $region4: #{tpu_custom_call.1} parent=1 // loop_header_branch
      %20 = sbr.rel (%p18) target = $region8
    $region5: #{tpu_custom_call.1} parent=1 // loop_body
      %s22 = ssub.s32 %s17, 1
      %s23 = ssub.s32 %s17, 2
      %s24 = sadd.s32 %s17, 1
      %s25 = ssub.s32 %s17, %s24
      %p26 = scmp.eq.s32.totalorder %s25, 0
      %s28 = sadd.s32 %s27, 1
      %s29 = scalar_select %p26, %s27, %s28
      %p32 = pneg %p26
      %p33 = scmp.eq.s32.totalorder %s17, 1
      %p34 = por %p32, %p33
      %p35 = scmp.ne.s32.totalorder %s27, %s30
      %p36 = scmp.eq.s32.totalorder %s17, 0
      %p37 = por %p35, %p36
      %p38 = scmp.ne.s32.totalorder %s27, %s30
      %p39 = scmp.eq.s32.totalorder %s22, 1
      %p40 = por %p38, %p39
      %p41 = scmp.ne.s32.totalorder %s30, %s31
      %p42 = scmp.eq.s32.totalorder %s22, 0
      %p43 = por %p41, %p42
      %p44 = scmp.ne.s32.totalorder %s30, %s31
      %p45 = scmp.eq.s32.totalorder %s23, 1
      %p46 = por %p44, %p45
      %p48 = scmp.ne.s32.totalorder %s31, %s47
      %p49 = scmp.eq.s32.totalorder %s23, 0
      %p50 = por %p48, %p49
      %s52 = sadd.s32 %s51, 1
      %p55 = scmp.eq.s32.totalorder %s17, 1
      %p56 = scmp.ne.s32.totalorder %s51, %s53
      %p57 = scmp.eq.s32.totalorder %s17, 0
      %p58 = por %p56, %p57
      %p59 = scmp.ne.s32.totalorder %s51, %s53
      %p60 = scmp.eq.s32.totalorder %s22, 1
      %p61 = por %p59, %p60
      %p62 = scmp.ne.s32.totalorder %s53, %s54
      %p63 = scmp.eq.s32.totalorder %s22, 0
      %p64 = por %p62, %p63
      %p65 = scmp.ne.s32.totalorder %s53, %s54
      %p66 = scmp.eq.s32.totalorder %s23, 1
      %p67 = por %p65, %p66
      %p69 = scmp.ne.s32.totalorder %s54, %s68
      %p70 = scmp.eq.s32.totalorder %s23, 0
      %p71 = por %p69, %p70
      %s73 = sadd.s32 %s72, 1
      %p76 = scmp.eq.s32.totalorder %s17, 1
      %p77 = scmp.ne.s32.totalorder %s72, %s74
      %p78 = scmp.eq.s32.totalorder %s17, 0
      %p79 = por %p77, %p78
      %p80 = scmp.ne.s32.totalorder %s72, %s74
      %p81 = scmp.eq.s32.totalorder %s22, 1
      %p82 = por %p80, %p81
      %p83 = scmp.ne.s32.totalorder %s74, %s75
      %p84 = scmp.eq.s32.totalorder %s22, 0
      %p85 = por %p83, %p84
      %p86 = scmp.ne.s32.totalorder %s74, %s75
      %p87 = scmp.eq.s32.totalorder %s23, 1
      %p88 = por %p86, %p87
      %p90 = scmp.ne.s32.totalorder %s75, %s89
      %p91 = scmp.eq.s32.totalorder %s23, 0
      %p92 = por %p90, %p91
      %s94 = sadd.s32 %s93, 1
      %p97 = scmp.eq.s32.totalorder %s17, 1
      %p98 = scmp.ne.s32.totalorder %s93, %s95
      %p99 = scmp.eq.s32.totalorder %s17, 0
      %p100 = por %p98, %p99
      %p101 = scmp.ne.s32.totalorder %s93, %s95
      %p102 = scmp.eq.s32.totalorder %s22, 1
      %p103 = por %p101, %p102
      %p104 = scmp.ne.s32.totalorder %s95, %s96
      %p105 = scmp.eq.s32.totalorder %s22, 0
      %p106 = por %p104, %p105
      %p107 = scmp.ne.s32.totalorder %s95, %s96
      %p108 = scmp.eq.s32.totalorder %s23, 1
      %p109 = por %p107, %p108
      %p111 = scmp.ne.s32.totalorder %s96, %s110
      %p112 = scmp.eq.s32.totalorder %s23, 0
      %p113 = por %p111, %p112
      %s114 = ssub.s32 %s17, %s24
      %p115 = scmp.eq.s32.totalorder %s114, 0
      %s117 = sadd.s32 %s116, 1
      %s118 = scalar_select %p115, %s116, %s117
      %p121 = pneg %p115
      %p122 = scmp.eq.s32.totalorder %s17, 1
      %p123 = por %p121, %p122
      %p124 = scmp.ne.s32.totalorder %s116, %s119
      %p125 = scmp.eq.s32.totalorder %s17, 0
      %p126 = por %p124, %p125
      %p127 = scmp.ne.s32.totalorder %s116, %s119
      %p128 = scmp.eq.s32.totalorder %s22, 1
      %p129 = por %p127, %p128
      %p130 = scmp.ne.s32.totalorder %s119, %s120
      %p131 = scmp.eq.s32.totalorder %s22, 0
      %p132 = por %p130, %p131
      %p133 = scmp.ne.s32.totalorder %s119, %s120
      %p134 = scmp.eq.s32.totalorder %s23, 1
      %p135 = por %p133, %p134
      %p137 = scmp.ne.s32.totalorder %s120, %s136
      %p138 = scmp.eq.s32.totalorder %s23, 0
      %p139 = por %p137, %p138
      %s140 = ssub.s32 %s17, %s24
      %p141 = scmp.eq.s32.totalorder %s140, 0
      %s143 = sadd.s32 %s142, 1
      %s144 = scalar_select %p141, %s142, %s143
      %p147 = pneg %p141
      %p148 = scmp.eq.s32.totalorder %s17, 1
      %p149 = por %p147, %p148
      %p150 = scmp.ne.s32.totalorder %s142, %s145
      %p151 = scmp.eq.s32.totalorder %s17, 0
      %p152 = por %p150, %p151
      %p153 = scmp.ne.s32.totalorder %s142, %s145
      %p154 = scmp.eq.s32.totalorder %s22, 1
      %p155 = por %p153, %p154
      %p156 = scmp.ne.s32.totalorder %s145, %s146
      %p157 = scmp.eq.s32.totalorder %s22, 0
      %p158 = por %p156, %p157
      %p159 = scmp.ne.s32.totalorder %s145, %s146
      %p160 = scmp.eq.s32.totalorder %s23, 1
      %p161 = por %p159, %p160
      %p163 = scmp.ne.s32.totalorder %s146, %s162
      %p164 = scmp.eq.s32.totalorder %s23, 0
      %p165 = por %p163, %p164
      %p166 = scmp.le.s32.totalorder 1, %s17
      %p167 = scmp.lt.s32.totalorder %s17, 3
      %p168 = pnand %p166, %p167
      %p169 = pneg %p168
      // Predicated region
      $region9: #{tpu_custom_call.1} parent=5 // pred_check
        _
      $region10: #{tpu_custom_call.1} parent=5 // pred_check_branch
        %171 = sbr.rel (%p168) target = $region12
      $region11: #{tpu_custom_call.1} parent=5 // pred_region
        %s172 = ssub.s32 %s17, 1
        // Predicated region
        $region13: #{tpu_custom_call.1} parent=11 // pred_check
          %p173 = pneg %p64
        $region14: #{tpu_custom_call.1} parent=11 // pred_check_branch
          %175 = sbr.rel (%p173) target = $region16
        $region15: #{tpu_custom_call.1} parent=11 // pred_region
          %s177 = ssub.s32 256, 256
          %178 = vsyncadd [#allocation4], %s177
          %s179 = sshll.u32 [#allocation3], 4
          %s180 = int_to_ptr.vmem [resolvable:$true] %s179
          %185 = dma.hbm_to_vmem [thread:$0]  %s1, 256, %s180, [#allocation4], 64, 64, 4
        $region16: #{tpu_custom_call.1} parent=11 // pred_fallthru
          _
        // Predicated region
        $region17: #{tpu_custom_call.1} parent=11 // pred_check
          %p186 = pneg %p85
        $region18: #{tpu_custom_call.1} parent=11 // pred_check_branch
          %188 = sbr.rel (%p186) target = $region20
        $region19: #{tpu_custom_call.1} parent=11 // pred_region
          %s190 = ssub.s32 256, 256
          %191 = vsyncadd [#allocation8], %s190
          %s192 = sshll.u32 [#allocation7], 4
          %s193 = int_to_ptr.vmem [resolvable:$true] %s192
          %198 = dma.hbm_to_vmem [thread:$0]  %s2, 256, %s193, [#allocation8], 64, 64, 4
        $region20: #{tpu_custom_call.1} parent=11 // pred_fallthru
          _
        // Predicated region
        $region21: #{tpu_custom_call.1} parent=11 // pred_check
          %p199 = pneg %p106
        $region22: #{tpu_custom_call.1} parent=11 // pred_check_branch
          %201 = sbr.rel (%p199) target = $region24
        $region23: #{tpu_custom_call.1} parent=11 // pred_region
          %s203 = ssub.s32 256, 256
          %204 = vsyncadd [#allocation6], %s203
          %s205 = sshll.u32 %s3, 4
          %s206 = int_to_ptr.vmem [resolvable:$true] %s205
          %211 = dma.vmem_to_smem %s206, 256, [#allocation9], [#allocation6], 128, 128, 8
        $region24: #{tpu_custom_call.1} parent=11 // pred_fallthru
          _
      $region12: #{tpu_custom_call.1} parent=5 // pred_fallthru
        _
      %p212 = scmp.lt.s32.totalorder %s17, 2
      // Predicated region
      $region25: #{tpu_custom_call.1} parent=5 // pred_check
        %p213 = pneg %p212
      $region26: #{tpu_custom_call.1} parent=5 // pred_check_branch
        %215 = sbr.rel (%p213) target = $region28
      $region27: #{tpu_custom_call.1} parent=5 // pred_region
        // Predicated region
        $region29: #{tpu_custom_call.1} parent=27 // pred_check
          %p216 = pneg %p37
        $region30: #{tpu_custom_call.1} parent=27 // pred_check_branch
          %218 = sbr.rel (%p216) target = $region32
        $region31: #{tpu_custom_call.1} parent=27 // pred_region
          %p219 = scmp.lt.s32.totalorder %s17, 1
          %s220 = scalar_select %p219, %s17, 1
          %s221 = smul.addr %s220, 2
          %s222 = smul.addr %s221, 4
          %s223 = scalar_lea.vmem %s0, %s222
        $region32: #{tpu_custom_call.1} parent=27 // pred_fallthru
          _
        // Predicated region
        $region33: #{tpu_custom_call.1} parent=27 // pred_check
          %p224 = pneg %p126
        $region34: #{tpu_custom_call.1} parent=27 // pred_check_branch
          %226 = sbr.rel (%p224) target = $region36
        $region35: #{tpu_custom_call.1} parent=27 // pred_region
          %p227 = scmp.lt.s32.totalorder %s17, 1
          %s228 = scalar_select %p227, %s17, 1
          %s229 = smul.addr %s228, 2
          %s230 = smul.addr %s229, 2
          %s231 = scalar_lea.vmem %s4, %s230
        $region36: #{tpu_custom_call.1} parent=27 // pred_fallthru
          _
      $region28: #{tpu_custom_call.1} parent=5 // pred_fallthru
        _
      %p232 = scmp.le.s32.totalorder 1, %s17
      %p233 = scmp.lt.s32.totalorder %s17, 3
      %p234 = pnand %p232, %p233
      %p235 = pneg %p234
      // Predicated region
      $region37: #{tpu_custom_call.1} parent=5 // pred_check
        _
      $region38: #{tpu_custom_call.1} parent=5 // pred_check_branch
        %237 = sbr.rel (%p234) target = $region40
      $region39: #{tpu_custom_call.1} parent=5 // pred_region
        %s238 = ssub.s32 %s17, 1
        // Predicated region
        $region41: #{tpu_custom_call.1} parent=39 // pred_check
          %p239 = pneg %p64
        $region42: #{tpu_custom_call.1} parent=39 // pred_check_branch
          %241 = sbr.rel (%p239) target = $region44
        $region43: #{tpu_custom_call.1} parent=39 // pred_region
          %242 = dma.done [#allocation4], 256
        $region44: #{tpu_custom_call.1} parent=39 // pred_fallthru
          _
        // Predicated region
        $region45: #{tpu_custom_call.1} parent=39 // pred_check
          %p243 = pneg %p85
        $region46: #{tpu_custom_call.1} parent=39 // pred_check_branch
          %245 = sbr.rel (%p243) target = $region48
        $region47: #{tpu_custom_call.1} parent=39 // pred_region
          %246 = dma.done [#allocation8], 256
        $region48: #{tpu_custom_call.1} parent=39 // pred_fallthru
          _
        // Predicated region
        $region49: #{tpu_custom_call.1} parent=39 // pred_check
          %p247 = pneg %p106
        $region50: #{tpu_custom_call.1} parent=39 // pred_check_branch
          %249 = sbr.rel (%p247) target = $region52
        $region51: #{tpu_custom_call.1} parent=39 // pred_region
          %250 = dma.done [#allocation6], 256
        $region52: #{tpu_custom_call.1} parent=39 // pred_fallthru
          _
        %251 = sfence
        %p252 = scmp.lt.s32.totalorder %s22, 1
        %s253 = scalar_select %p252, %s22, 1
        %s254 = smul.addr %s253, 2
        %s255 = smul.addr %s254, 4
        %s256 = scalar_lea.vmem %s0, %s255
        %p257 = pneg %p43
        %p258 = pneg %p40
        %p259 = pneg %p64
        %p260 = pneg %p61
        %p261 = pneg %p85
        %p262 = pneg %p82
        %p263 = pneg %p106
        %p264 = pneg %p103
        %p265 = scmp.lt.s32.totalorder %s22, 1
        %s266 = scalar_select %p265, %s22, 1
        %s267 = smul.addr %s266, 2
        %s268 = smul.addr %s267, 2
        %s269 = scalar_lea.vmem %s4, %s268
        %p270 = pneg %p132
        %p271 = pneg %p129
        %p272 = pneg %p158
        %p273 = pneg %p155
        %s274 = sand.u32 %s145, 1
        %s275 = scalar_lea.sflag [#allocation5], %s274
        %s276 = sand.u32 %s145, 1
        %s277 = smul.addr %s276, 16
        %s278 = scalar_lea.vmem [#allocation10], %s277
        %p279 = scmp.lt.s32.totalorder %s22, 1
        %s280 = scalar_select %p279, %s22, 1
        %s281 = smul.addr %s280, 2
        %s282 = smul.addr %s281, 4
        %s283 = scalar_lea.vmem %s0, %s282
        %p284 = scmp.lt.s32.totalorder %s22, 1
        %s285 = scalar_select %p284, %s22, 1
        %s286 = smul.addr %s285, 2
        %s287 = smul.addr %s286, 2
        %s288 = scalar_lea.vmem %s4, %s287
        %v290 = vld [vmem:[%s283] sm:$0xf]
        %v291 = vld [vmem:[%s283 + $0x4] sm:$0xf]
        %v292 = vld [vmem:[#allocation3] sm:$0xf]
        %v293 = vld [vmem:[#allocation3 + $0x4] sm:$0xf]
        %v294 = vld [vmem:[#allocation3 + $0x8] sm:$0xf]
        %v295 = vld [vmem:[#allocation3 + $0xc] sm:$0xf]
        %v298 = vunpack.c.l.b16 %v290
        %v299 = vunpack.c.l.b16 %v291
        %v300 = vpack.c.b16 %v299, %v298
        %v305 = vunpack.c.l.b16 %v292
        %v306 = vunpack.c.l.b16 %v293
        %v307 = vunpack.c.l.b16 %v294
        %v308 = vunpack.c.l.b16 %v295
        %v309 = vpack.c.b16 %v306, %v305
        %v310 = vpack.c.b16 %v308, %v307
        %vm313 = vcmask 261120
        %v315 = vsel %vm313, %v300, 0
        %317 = vmatprep.subr.bf16.mxu0 0
        %318 = vmatpush1.bf16.msra.mxu0 %v309
        %319 = vmatprep.subr.bf16.mxu0 0
        %320 = vmatpush1.bf16.msra.mxu0 %v310
        %321 = vmatprep.subr.bf16.mxu0 0
        %322 = vmatpush1.bf16.msra.mxu0 0
        %323 = vmatprep.subr.bf16.mxu0 0
        %324 = vmatpush1.bf16.msra.mxu0 0
        %325 = vmatprep.subr.bf16.mxu0 0
        %326 = vmatpush1.bf16.msra.mxu0 0
        %327 = vmatprep.subr.bf16.mxu0 0
        %328 = vmatpush1.bf16.msra.mxu0 0
        %329 = vmatprep.subr.bf16.mxu0 0
        %330 = vmatpush1.bf16.msra.mxu0 0
        %331 = vmatprep.subr.bf16.mxu0 0
        %332 = vmatpush1.bf16.msra.mxu0 0
        %333 = vmatprep.subr.bf16.mxu0 0
        %334 = vmatpush1.bf16.msra.mxu0 0
        %335 = vmatprep.subr.bf16.mxu0 0
        %336 = vmatpush1.bf16.msra.mxu0 0
        %337 = vmatprep.subr.bf16.mxu0 0
        %338 = vmatpush1.bf16.msra.mxu0 0
        %339 = vmatprep.subr.bf16.mxu0 0
        %340 = vmatpush1.bf16.msra.mxu0 0
        %341 = vmatprep.subr.bf16.mxu0 0
        %342 = vmatpush1.bf16.msra.mxu0 0
        %343 = vmatprep.subr.bf16.mxu0 0
        %344 = vmatpush1.bf16.msra.mxu0 0
        %345 = vmatprep.subr.bf16.mxu0 0
        %346 = vmatpush1.bf16.msra.mxu0 0
        %347 = vmatprep.subr.bf16.mxu0 0
        %348 = vmatpush1.bf16.msra.mxu0 0
        %349 = vmatprep.mubr.bf16.mxu0 0
        %350 = vmatmul.mubr.bf16.gmra.mrb[0].mxu0 %v315
        %v351 = vpop.f32.mrb[0].mxu0
        %v352 = vadd.f32 0.0, %v351
        %v353 = vpop.f32.mrb[0].mxu0
        %v354 = vpop.f32.mrb[0].mxu0
        %v355 = vadd.f32 0.0, %v354
        %v356 = vpop.f32.mrb[0].mxu0
        %357 = vdwg.mxu0
        %v358 = vpack.c.bf16 %v355, %v352
        %v359 = vld [vmem:[%s288] sm:$0x3]
        %v360 = vld [vmem:[%s288 + $0x2] sm:$0x3]
        %v361 = vunpack.c.0.s8 %v359
        %v362 = vunpack.c.0.s8 %v360
        %vm363 = vcmp.eq.s32.totalorder %v361, 0
        %vm364 = vcmp.eq.s32.totalorder %v362, 0
        %v365 = vsel %vm363, 1, 0
        %v366 = vsel %vm364, 1, 0
        %v367 = vcvt.s32.f32 %v365
        %v368 = vcvt.s32.f32 %v366
        %vm369 = vcmp.eq.s32.totalorder %v361, 1
        %vm370 = vcmp.eq.s32.totalorder %v362, 1
        %v371 = vsel %vm369, 1, 0
        %v372 = vsel %vm370, 1, 0
        %v373 = vcvt.s32.f32 %v371
        %v374 = vcvt.s32.f32 %v372
        %vm375 = vcmp.eq.s32.totalorder %v361, 2
        %vm376 = vcmp.eq.s32.totalorder %v362, 2
        %v377 = vsel %vm375, 1, 0
        %v378 = vsel %vm376, 1, 0
        %v379 = vcvt.s32.f32 %v377
        %v380 = vcvt.s32.f32 %v378
        %vm381 = vcmp.eq.s32.totalorder %v361, 3
        %vm382 = vcmp.eq.s32.totalorder %v362, 3
        %v383 = vsel %vm381, 1, 0
        %v384 = vsel %vm382, 1, 0
        %v385 = vcvt.s32.f32 %v383
        %v386 = vcvt.s32.f32 %v384
        %vm387 = vcmp.eq.s32.totalorder %v361, 4
        %vm388 = vcmp.eq.s32.totalorder %v362, 4
        %v389 = vsel %vm387, 1, 0
        %v390 = vsel %vm388, 1, 0
        %v391 = vcvt.s32.f32 %v389
        %v392 = vcvt.s32.f32 %v390
        %vm393 = vcmp.eq.s32.totalorder %v361, 5
        %vm394 = vcmp.eq.s32.totalorder %v362, 5
        %v395 = vsel %vm393, 1, 0
        %v396 = vsel %vm394, 1, 0
        %v397 = vcvt.s32.f32 %v395
        %v398 = vcvt.s32.f32 %v396
        %vm399 = vcmp.eq.s32.totalorder %v361, 6
        %vm400 = vcmp.eq.s32.totalorder %v362, 6
        %v401 = vsel %vm399, 1, 0
        %v402 = vsel %vm400, 1, 0
        %v403 = vcvt.s32.f32 %v401
        %v404 = vcvt.s32.f32 %v402
        %vm405 = vcmp.eq.s32.totalorder %v361, 7
        %vm406 = vcmp.eq.s32.totalorder %v362, 7
        %v407 = vsel %vm405, 1, 0
        %v408 = vsel %vm406, 1, 0
        %v409 = vcvt.s32.f32 %v407
        %v410 = vcvt.s32.f32 %v408
        %vm411 = vcmp.eq.s32.totalorder %v361, 8
        %vm412 = vcmp.eq.s32.totalorder %v362, 8
        %v413 = vsel %vm411, 1, 0
        %v414 = vsel %vm412, 1, 0
        %v415 = vcvt.s32.f32 %v413
        %v416 = vcvt.s32.f32 %v414
        %s417 = sld [smem:[#allocation9]]
        %v418 = vstv %s417
        %v419 = vmul.f32 %v367, %v418
        %v420 = vmul.f32 %v368, %v418
        %422 = vrot.lane.b32.xlu0 %v358, 96
        %v423 = vpop.permute.xlu0 %422
        %vm424 = vcmask 64512
        %v426 = vsel %vm424, %v358, 0
        %v429 = vsel %vm424, %v423, 0
        %431 = vmatprep.subr.bf16.mxu0 0
        %432 = vmatpush1.bf16.xpose.msra.mxu0 %v429
        %433 = vmatprep.subr.bf16.mxu0 0
        %434 = vmatpush1.bf16.xpose.msra.mxu0 0
        %435 = vmatprep.subr.bf16.mxu0 0
        %436 = vmatpush1.bf16.xpose.msra.mxu0 0
        %437 = vmatprep.subr.bf16.mxu0 0
        %438 = vmatpush1.bf16.xpose.msra.mxu0 0
        %439 = vmatprep.subr.bf16.mxu0 0
        %440 = vmatpush1.bf16.xpose.msra.mxu0 0
        %441 = vmatprep.subr.bf16.mxu0 0
        %442 = vmatpush1.bf16.xpose.msra.mxu0 0
        %443 = vmatprep.subr.bf16.mxu0 0
        %444 = vmatpush1.bf16.xpose.msra.mxu0 0
        %445 = vmatprep.subr.bf16.mxu0 0
        %446 = vmatpush1.bf16.xpose.msra.mxu0 0
        %447 = vmatprep.subr.bf16.mxu0 0
        %448 = vmatpush1.bf16.xpose.msra.mxu0 0
        %449 = vmatprep.subr.bf16.mxu0 0
        %450 = vmatpush1.bf16.xpose.msra.mxu0 0
        %451 = vmatprep.subr.bf16.mxu0 0
        %452 = vmatpush1.bf16.xpose.msra.mxu0 0
        %453 = vmatprep.subr.bf16.mxu0 0
        %454 = vmatpush1.bf16.xpose.msra.mxu0 0
        %455 = vmatprep.subr.bf16.mxu0 0
        %456 = vmatpush1.bf16.xpose.msra.mxu0 0
        %457 = vmatprep.subr.bf16.mxu0 0
        %458 = vmatpush1.bf16.xpose.msra.mxu0 0
        %459 = vmatprep.subr.bf16.mxu0 0
        %460 = vmatpush1.bf16.xpose.msra.mxu0 0
        %461 = vmatprep.subr.bf16.mxu0 0
        %462 = vmatpush1.bf16.xpose.msra.mxu0 0
        %463 = vmatprep.mubr.bf16.mxu0 0
        %464 = vmatmul.mubr.bf16.gmra.mrb[0].mxu0 %v426
        %v465 = vpop.f32.mrb[0].mxu0
        %v466 = vadd.f32 %v419, %v465
        %v467 = vpop.f32.mrb[0].mxu0
        %v468 = vpop.f32.mrb[0].mxu0
        %v469 = vadd.f32 %v420, %v468
        %v470 = vpop.f32.mrb[0].mxu0
        %471 = vdwg.mxu0
        %s472 = sld [smem:[#allocation9 + $0x80]]
        %v473 = vstv %s472
        %v474 = vmul.f32 %v373, %v473
        %v475 = vmul.f32 %v374, %v473
        %v476 = vadd.f32 %v466, %v474
        %v477 = vadd.f32 %v469, %v475
        %s478 = sld [smem:[#allocation9 + $0x100]]
        %v479 = vstv %s478
        %v480 = vmul.f32 %v379, %v479
        %v481 = vmul.f32 %v380, %v479
        %v482 = vadd.f32 %v476, %v480
        %v483 = vadd.f32 %v477, %v481
        %s484 = sld [smem:[#allocation9 + $0x180]]
        %v485 = vstv %s484
        %v486 = vmul.f32 %v385, %v485
        %v487 = vmul.f32 %v386, %v485
        %v488 = vadd.f32 %v482, %v486
        %v489 = vadd.f32 %v483, %v487
        %s490 = sld [smem:[#allocation9 + $0x200]]
        %v491 = vstv %s490
        %v492 = vmul.f32 %v391, %v491
        %v493 = vmul.f32 %v392, %v491
        %v494 = vadd.f32 %v488, %v492
        %v495 = vadd.f32 %v489, %v493
        %s496 = sld [smem:[#allocation9 + $0x280]]
        %v497 = vstv %s496
        %v498 = vmul.f32 %v397, %v497
        %v499 = vmul.f32 %v398, %v497
        %v500 = vadd.f32 %v494, %v498
        %v501 = vadd.f32 %v495, %v499
        %s502 = sld [smem:[#allocation9 + $0x300]]
        %v503 = vstv %s502
        %v504 = vmul.f32 %v403, %v503
        %v505 = vmul.f32 %v404, %v503
        %v506 = vadd.f32 %v500, %v504
        %v507 = vadd.f32 %v501, %v505
        %s508 = sld [smem:[#allocation9 + $0x380]]
        %v509 = vstv %s508
        %v510 = vmul.f32 %v409, %v509
        %v511 = vmul.f32 %v410, %v509
        %v512 = vadd.f32 %v506, %v510
        %v513 = vadd.f32 %v507, %v511
        %s514 = sld [smem:[#allocation9 + $0x400]]
        %v515 = vstv %s514
        %v516 = vmul.f32 %v415, %v515
        %v517 = vmul.f32 %v416, %v515
        %v518 = vadd.f32 %v512, %v516
        %v519 = vadd.f32 %v513, %v517
        %vm520 = vcmask 130048
        %v521 = vsel %vm520, %v518, -inf
        %522 = vmax.xlane.f32.xlu0 %v521
        %v523 = vpop.xlane.xlu0 %522
        %v524 = vsel %vm520, %v519, -inf
        %525 = vmax.xlane.f32.xlu0 %v524
        %v526 = vpop.xlane.xlu0 %525
        %v527 = vsub.f32 %v518, %v523
        %v528 = vsub.f32 %v519, %v526
        %v529 = vmul.f32 %v527, 1.442695
        %v530 = vpow.pop %v529
        %v531 = vmul.f32 %v528, 1.442695
        %v532 = vpow.pop %v531
        %v533 = vsel %vm520, %v530, 0.0
        %534 = vadd.xlane.f32.xlu0 %v533
        %v535 = vpop.xlane.xlu0 %534
        %v536 = vsel %vm520, %v532, 0.0
        %537 = vadd.xlane.f32.xlu0 %v536
        %v538 = vpop.xlane.xlu0 %537
        %v539 = vpack.c.bf16 %v532, %v530
        %540 = vrot.lane.b32.xlu0 %v358, 64
        %v541 = vpop.permute.xlu0 %540
        %v544 = vsel %vm520, %v539, 0
        %546 = vmatprep.subr.bf16.mxu0 0
        %547 = vmatpush1.bf16.msra.mxu0 %v541
        %548 = vmatprep.subr.bf16.mxu0 0
        %549 = vmatpush1.bf16.msra.mxu0 0
        %550 = vmatprep.subr.bf16.mxu0 0
        %551 = vmatpush1.bf16.msra.mxu0 0
        %552 = vmatprep.subr.bf16.mxu0 0
        %553 = vmatpush1.bf16.msra.mxu0 0
        %554 = vmatprep.subr.bf16.mxu0 0
        %555 = vmatpush1.bf16.msra.mxu0 0
        %556 = vmatprep.subr.bf16.mxu0 0
        %557 = vmatpush1.bf16.msra.mxu0 0
        %558 = vmatprep.subr.bf16.mxu0 0
        %559 = vmatpush1.bf16.msra.mxu0 0
        %560 = vmatprep.subr.bf16.mxu0 0
        %561 = vmatpush1.bf16.msra.mxu0 0
        %562 = vmatprep.subr.bf16.mxu0 0
        %563 = vmatpush1.bf16.msra.mxu0 0
        %564 = vmatprep.subr.bf16.mxu0 0
        %565 = vmatpush1.bf16.msra.mxu0 0
        %566 = vmatprep.subr.bf16.mxu0 0
        %567 = vmatpush1.bf16.msra.mxu0 0
        %568 = vmatprep.subr.bf16.mxu0 0
        %569 = vmatpush1.bf16.msra.mxu0 0
        %570 = vmatprep.subr.bf16.mxu0 0
        %571 = vmatpush1.bf16.msra.mxu0 0
        %572 = vmatprep.subr.bf16.mxu0 0
        %573 = vmatpush1.bf16.msra.mxu0 0
        %574 = vmatprep.subr.bf16.mxu0 0
        %575 = vmatpush1.bf16.msra.mxu0 0
        %576 = vmatprep.subr.bf16.mxu0 0
        %577 = vmatpush1.bf16.msra.mxu0 0
        %578 = vmatprep.mubr.bf16.mxu0 0
        %579 = vmatmul.mubr.bf16.gmra.mrb[0].mxu0 %v544
        %v580 = vpop.f32.mrb[0].mxu0
        %v581 = vadd.f32 0.0, %v580
        %v582 = vpop.f32.mrb[0].mxu0
        %v583 = vpop.f32.mrb[0].mxu0
        %v584 = vadd.f32 0.0, %v583
        %v585 = vpop.f32.mrb[0].mxu0
        %586 = vdwg.mxu0
        %v587 = vrcp.pop %v535
        %v588 = vrcp.pop %v538
        %v589 = vmul.f32 %v581, %v587
        %v590 = vmul.f32 %v584, %v588
        %v591 = vpack.c.bf16 %v590, %v589
        %592 = vst.msk [vmem:[#allocation2] sm:$0xff] %vm424, %v591
        %s593 = sld [smem:[#allocation9 + $0x1]]
        %v594 = vstv %s593
        %v595 = vmul.f32 %v367, %v594
        %v596 = vmul.f32 %v368, %v594
        %597 = vrot.lane.b32.xlu0 %v358, 120
        %v598 = vpop.permute.xlu0 %597
        %599 = vrot.lane.b32.xlu0 %v358, 88
        %v600 = vpop.permute.xlu0 %599
        %v602 = vsel %vm424, %v598, 0
        %v605 = vsel %vm424, %v600, 0
        %607 = vmatprep.subr.bf16.mxu0 0
        %608 = vmatpush1.bf16.xpose.msra.mxu0 %v605
        %609 = vmatprep.subr.bf16.mxu0 0
        %610 = vmatpush1.bf16.xpose.msra.mxu0 0
        %611 = vmatprep.subr.bf16.mxu0 0
        %612 = vmatpush1.bf16.xpose.msra.mxu0 0
        %613 = vmatprep.subr.bf16.mxu0 0
        %614 = vmatpush1.bf16.xpose.msra.mxu0 0
        %615 = vmatprep.subr.bf16.mxu0 0
        %616 = vmatpush1.bf16.xpose.msra.mxu0 0
        %617 = vmatprep.subr.bf16.mxu0 0
        %618 = vmatpush1.bf16.xpose.msra.mxu0 0
        %619 = vmatprep.subr.bf16.mxu0 0
        %620 = vmatpush1.bf16.xpose.msra.mxu0 0
        %621 = vmatprep.subr.bf16.mxu0 0
        %622 = vmatpush1.bf16.xpose.msra.mxu0 0
        %623 = vmatprep.subr.bf16.mxu0 0
        %624 = vmatpush1.bf16.xpose.msra.mxu0 0
        %625 = vmatprep.subr.bf16.mxu0 0
        %626 = vmatpush1.bf16.xpose.msra.mxu0 0
        %627 = vmatprep.subr.bf16.mxu0 0
        %628 = vmatpush1.bf16.xpose.msra.mxu0 0
        %629 = vmatprep.subr.bf16.mxu0 0
        %630 = vmatpush1.bf16.xpose.msra.mxu0 0
        %631 = vmatprep.subr.bf16.mxu0 0
        %632 = vmatpush1.bf16.xpose.msra.mxu0 0
        %633 = vmatprep.subr.bf16.mxu0 0
        %634 = vmatpush1.bf16.xpose.msra.mxu0 0
        %635 = vmatprep.subr.bf16.mxu0 0
        %636 = vmatpush1.bf16.xpose.msra.mxu0 0
        %637 = vmatprep.subr.bf16.mxu0 0
        %638 = vmatpush1.bf16.xpose.msra.mxu0 0
        %639 = vmatprep.mubr.bf16.mxu0 0
        %640 = vmatmul.mubr.bf16.gmra.mrb[0].mxu0 %v602
        %v641 = vpop.f32.mrb[0].mxu0
        %v642 = vadd.f32 %v595, %v641
        %v643 = vpop.f32.mrb[0].mxu0
        %v644 = vpop.f32.mrb[0].mxu0
        %v645 = vadd.f32 %v596, %v644
        %v646 = vpop.f32.mrb[0].mxu0
        %647 = vdwg.mxu0
        %s648 = sld [smem:[#allocation9 + $0x81]]
        %v649 = vstv %s648
        %v650 = vmul.f32 %v373, %v649
        %v651 = vmul.f32 %v374, %v649
        %v652 = vadd.f32 %v642, %v650
        %v653 = vadd.f32 %v645, %v651
        %s654 = sld [smem:[#allocation9 + $0x101]]
        %v655 = vstv %s654
        %v656 = vmul.f32 %v379, %v655
        %v657 = vmul.f32 %v380, %v655
        %v658 = vadd.f32 %v652, %v656
        %v659 = vadd.f32 %v653, %v657
        %s660 = sld [smem:[#allocation9 + $0x181]]
        %v661 = vstv %s660
        %v662 = vmul.f32 %v385, %v661
        %v663 = vmul.f32 %v386, %v661
        %v664 = vadd.f32 %v658, %v662
        %v665 = vadd.f32 %v659, %v663
        %s666 = sld [smem:[#allocation9 + $0x201]]
        %v667 = vstv %s666
        %v668 = vmul.f32 %v391, %v667
        %v669 = vmul.f32 %v392, %v667
        %v670 = vadd.f32 %v664, %v668
        %v671 = vadd.f32 %v665, %v669
        %s672 = sld [smem:[#allocation9 + $0x281]]
        %v673 = vstv %s672
        %v674 = vmul.f32 %v397, %v673
        %v675 = vmul.f32 %v398, %v673
        %v676 = vadd.f32 %v670, %v674
        %v677 = vadd.f32 %v671, %v675
        %s678 = sld [smem:[#allocation9 + $0x301]]
        %v679 = vstv %s678
        %v680 = vmul.f32 %v403, %v679
        %v681 = vmul.f32 %v404, %v679
        %v682 = vadd.f32 %v676, %v680
        %v683 = vadd.f32 %v677, %v681
        %s684 = sld [smem:[#allocation9 + $0x381]]
        %v685 = vstv %s684
        %v686 = vmul.f32 %v409, %v685
        %v687 = vmul.f32 %v410, %v685
        %v688 = vadd.f32 %v682, %v686
        %v689 = vadd.f32 %v683, %v687
        %s690 = sld [smem:[#allocation9 + $0x401]]
        %v691 = vstv %s690
        %v692 = vmul.f32 %v415, %v691
        %v693 = vmul.f32 %v416, %v691
        %v694 = vadd.f32 %v688, %v692
        %v695 = vadd.f32 %v689, %v693
        %v696 = vsel %vm520, %v694, -inf
        %697 = vmax.xlane.f32.xlu0 %v696
        %v698 = vpop.xlane.xlu0 %697
        %v699 = vsel %vm520, %v695, -inf
        %700 = vmax.xlane.f32.xlu0 %v699
        %v701 = vpop.xlane.xlu0 %700
        %v702 = vsub.f32 %v694, %v698
        %v703 = vsub.f32 %v695, %v701
        %v704 = vmul.f32 %v702, 1.442695
        %v705 = vpow.pop %v704
        %v706 = vmul.f32 %v703, 1.442695
        %v707 = vpow.pop %v706
        %v708 = vsel %vm520, %v705, 0.0
        %709 = vadd.xlane.f32.xlu0 %v708
        %v710 = vpop.xlane.xlu0 %709
        %v711 = vsel %vm520, %v707, 0.0
        %712 = vadd.xlane.f32.xlu0 %v711
        %v713 = vpop.xlane.xlu0 %712
        %v714 = vpack.c.bf16 %v707, %v705
        %715 = vrot.lane.b32.xlu0 %v358, 56
        %v716 = vpop.permute.xlu0 %715
        %v719 = vsel %vm520, %v714, 0
        %721 = vmatprep.subr.bf16.mxu0 0
        %722 = vmatpush1.bf16.msra.mxu0 %v716
        %723 = vmatprep.subr.bf16.mxu0 0
        %724 = vmatpush1.bf16.msra.mxu0 0
        %725 = vmatprep.subr.bf16.mxu0 0
        %726 = vmatpush1.bf16.msra.mxu0 0
        %727 = vmatprep.subr.bf16.mxu0 0
        %728 = vmatpush1.bf16.msra.mxu0 0
        %729 = vmatprep.subr.bf16.mxu0 0
        %730 = vmatpush1.bf16.msra.mxu0 0
        %731 = vmatprep.subr.bf16.mxu0 0
        %732 = vmatpush1.bf16.msra.mxu0 0
        %733 = vmatprep.subr.bf16.mxu0 0
        %734 = vmatpush1.bf16.msra.mxu0 0
        %735 = vmatprep.subr.bf16.mxu0 0
        %736 = vmatpush1.bf16.msra.mxu0 0
        %737 = vmatprep.subr.bf16.mxu0 0
        %738 = vmatpush1.bf16.msra.mxu0 0
        %739 = vmatprep.subr.bf16.mxu0 0
        %740 = vmatpush1.bf16.msra.mxu0 0
        %741 = vmatprep.subr.bf16.mxu0 0
        %742 = vmatpush1.bf16.msra.mxu0 0
        %743 = vmatprep.subr.bf16.mxu0 0
        %744 = vmatpush1.bf16.msra.mxu0 0
        %745 = vmatprep.subr.bf16.mxu0 0
        %746 = vmatpush1.bf16.msra.mxu0 0
        %747 = vmatprep.subr.bf16.mxu0 0
        %748 = vmatpush1.bf16.msra.mxu0 0
        %749 = vmatprep.subr.bf16.mxu0 0
        %750 = vmatpush1.bf16.msra.mxu0 0
        %751 = vmatprep.subr.bf16.mxu0 0
        %752 = vmatpush1.bf16.msra.mxu0 0
        %753 = vmatprep.mubr.bf16.mxu0 0
        %754 = vmatmul.mubr.bf16.gmra.mrb[0].mxu0 %v719
        %v755 = vpop.f32.mrb[0].mxu0
        %v756 = vadd.f32 0.0, %v755
        %v757 = vpop.f32.mrb[0].mxu0
        %v758 = vpop.f32.mrb[0].mxu0
        %v759 = vadd.f32 0.0, %v758
        %v760 = vpop.f32.mrb[0].mxu0
        %761 = vdwg.mxu0
        %v762 = vrcp.pop %v710
        %v763 = vrcp.pop %v713
        %v764 = vmul.f32 %v756, %v762
        %v765 = vmul.f32 %v759, %v763
        %v766 = vpack.c.bf16 %v765, %v764
        %768 = vrot.lane.b32.xlu0 %v766, 8
        %v769 = vpop.permute.xlu0 %768
        %vm771 = vcmask 130112
        %772 = vst.msk [vmem:[#allocation2] sm:$0xff] %vm771, %v769
        %s773 = sld [smem:[#allocation9 + $0x2]]
        %v774 = vstv %s773
        %v775 = vmul.f32 %v367, %v774
        %v776 = vmul.f32 %v368, %v774
        %777 = vrot.lane.b32.xlu0 %v358, 112
        %v778 = vpop.permute.xlu0 %777
        %779 = vrot.lane.b32.xlu0 %v358, 80
        %v780 = vpop.permute.xlu0 %779
        %v782 = vsel %vm424, %v778, 0
        %v785 = vsel %vm424, %v780, 0
        %787 = vmatprep.subr.bf16.mxu0 0
        %788 = vmatpush1.bf16.xpose.msra.mxu0 %v785
        %789 = vmatprep.subr.bf16.mxu0 0
        %790 = vmatpush1.bf16.xpose.msra.mxu0 0
        %791 = vmatprep.subr.bf16.mxu0 0
        %792 = vmatpush1.bf16.xpose.msra.mxu0 0
        %793 = vmatprep.subr.bf16.mxu0 0
        %794 = vmatpush1.bf16.xpose.msra.mxu0 0
        %795 = vmatprep.subr.bf16.mxu0 0
        %796 = vmatpush1.bf16.xpose.msra.mxu0 0
        %797 = vmatprep.subr.bf16.mxu0 0
        %798 = vmatpush1.bf16.xpose.msra.mxu0 0
        %799 = vmatprep.subr.bf16.mxu0 0
        %800 = vmatpush1.bf16.xpose.msra.mxu0 0
        %801 = vmatprep.subr.bf16.mxu0 0
        %802 = vmatpush1.bf16.xpose.msra.mxu0 0
        %803 = vmatprep.subr.bf16.mxu0 0
        %804 = vmatpush1.bf16.xpose.msra.mxu0 0
        %805 = vmatprep.subr.bf16.mxu0 0
        %806 = vmatpush1.bf16.xpose.msra.mxu0 0
        %807 = vmatprep.subr.bf16.mxu0 0
        %808 = vmatpush1.bf16.xpose.msra.mxu0 0
        %809 = vmatprep.subr.bf16.mxu0 0
        %810 = vmatpush1.bf16.xpose.msra.mxu0 0
        %811 = vmatprep.subr.bf16.mxu0 0
        %812 = vmatpush1.bf16.xpose.msra.mxu0 0
        %813 = vmatprep.subr.bf16.mxu0 0
        %814 = vmatpush1.bf16.xpose.msra.mxu0 0
        %815 = vmatprep.subr.bf16.mxu0 0
        %816 = vmatpush1.bf16.xpose.msra.mxu0 0
        %817 = vmatprep.subr.bf16.mxu0 0
        %818 = vmatpush1.bf16.xpose.msra.mxu0 0
        %819 = vmatprep.mubr.bf16.mxu0 0
        %820 = vmatmul.mubr.bf16.gmra.mrb[0].mxu0 %v782
        %v821 = vpop.f32.mrb[0].mxu0
        %v822 = vadd.f32 %v775, %v821
        %v823 = vpop.f32.mrb[0].mxu0
        %v824 = vpop.f32.mrb[0].mxu0
        %v825 = vadd.f32 %v776, %v824
        %v826 = vpop.f32.mrb[0].mxu0
        %827 = vdwg.mxu0
        %s828 = sld [smem:[#allocation9 + $0x82]]
        %v829 = vstv %s828
        %v830 = vmul.f32 %v373, %v829
        %v831 = vmul.f32 %v374, %v829
        %v832 = vadd.f32 %v822, %v830
        %v833 = vadd.f32 %v825, %v831
        %s834 = sld [smem:[#allocation9 + $0x102]]
        %v835 = vstv %s834
        %v836 = vmul.f32 %v379, %v835
        %v837 = vmul.f32 %v380, %v835
        %v838 = vadd.f32 %v832, %v836
        %v839 = vadd.f32 %v833, %v837
        %s840 = sld [smem:[#allocation9 + $0x182]]
        %v841 = vstv %s840
        %v842 = vmul.f32 %v385, %v841
        %v843 = vmul.f32 %v386, %v841
        %v844 = vadd.f32 %v838, %v842
        %v845 = vadd.f32 %v839, %v843
        %s846 = sld [smem:[#allocation9 + $0x202]]
        %v847 = vstv %s846
        %v848 = vmul.f32 %v391, %v847
        %v849 = vmul.f32 %v392, %v847
        %v850 = vadd.f32 %v844, %v848
        %v851 = vadd.f32 %v845, %v849
        %s852 = sld [smem:[#allocation9 + $0x282]]
        %v853 = vstv %s852
        %v854 = vmul.f32 %v397, %v853
        %v855 = vmul.f32 %v398, %v853
        %v856 = vadd.f32 %v850, %v854
        %v857 = vadd.f32 %v851, %v855
        %s858 = sld [smem:[#allocation9 + $0x302]]
        %v859 = vstv %s858
        %v860 = vmul.f32 %v403, %v859
        %v861 = vmul.f32 %v404, %v859
        %v862 = vadd.f32 %v856, %v860
        %v863 = vadd.f32 %v857, %v861
        %s864 = sld [smem:[#allocation9 + $0x382]]
        %v865 = vstv %s864
        %v866 = vmul.f32 %v409, %v865
        %v867 = vmul.f32 %v410, %v865
        %v868 = vadd.f32 %v862, %v866
        %v869 = vadd.f32 %v863, %v867
        %s870 = sld [smem:[#allocation9 + $0x402]]
        %v871 = vstv %s870
        %v872 = vmul.f32 %v415, %v871
        %v873 = vmul.f32 %v416, %v871
        %v874 = vadd.f32 %v868, %v872
        %v875 = vadd.f32 %v869, %v873
        %v876 = vsel %vm520, %v874, -inf
        %877 = vmax.xlane.f32.xlu0 %v876
        %v878 = vpop.xlane.xlu0 %877
        %v879 = vsel %vm520, %v875, -inf
        %880 = vmax.xlane.f32.xlu0 %v879
        %v881 = vpop.xlane.xlu0 %880
        %v882 = vsub.f32 %v874, %v878
        %v883 = vsub.f32 %v875, %v881
        %v884 = vmul.f32 %v882, 1.442695
        %v885 = vpow.pop %v884
        %v886 = vmul.f32 %v883, 1.442695
        %v887 = vpow.pop %v886
        %v888 = vsel %vm520, %v885, 0.0
        %889 = vadd.xlane.f32.xlu0 %v888
        %v890 = vpop.xlane.xlu0 %889
        %v891 = vsel %vm520, %v887, 0.0
        %892 = vadd.xlane.f32.xlu0 %v891
        %v893 = vpop.xlane.xlu0 %892
        %v894 = vpack.c.bf16 %v887, %v885
        %895 = vrot.lane.b32.xlu0 %v358, 48
        %v896 = vpop.permute.xlu0 %895
        %v899 = vsel %vm520, %v894, 0
        %901 = vmatprep.subr.bf16.mxu0 0
        %902 = vmatpush1.bf16.msra.mxu0 %v896
        %903 = vmatprep.subr.bf16.mxu0 0
        %904 = vmatpush1.bf16.msra.mxu0 0
        %905 = vmatprep.subr.bf16.mxu0 0
        %906 = vmatpush1.bf16.msra.mxu0 0
        %907 = vmatprep.subr.bf16.mxu0 0
        %908 = vmatpush1.bf16.msra.mxu0 0
        %909 = vmatprep.subr.bf16.mxu0 0
        %910 = vmatpush1.bf16.msra.mxu0 0
        %911 = vmatprep.subr.bf16.mxu0 0
        %912 = vmatpush1.bf16.msra.mxu0 0
        %913 = vmatprep.subr.bf16.mxu0 0
        %914 = vmatpush1.bf16.msra.mxu0 0
        %915 = vmatprep.subr.bf16.mxu0 0
        %916 = vmatpush1.bf16.msra.mxu0 0
        %917 = vmatprep.subr.bf16.mxu0 0
        %918 = vmatpush1.bf16.msra.mxu0 0
        %919 = vmatprep.subr.bf16.mxu0 0
        %920 = vmatpush1.bf16.msra.mxu0 0
        %921 = vmatprep.subr.bf16.mxu0 0
        %922 = vmatpush1.bf16.msra.mxu0 0
        %923 = vmatprep.subr.bf16.mxu0 0
        %924 = vmatpush1.bf16.msra.mxu0 0
        %925 = vmatprep.subr.bf16.mxu0 0
        %926 = vmatpush1.bf16.msra.mxu0 0
        %927 = vmatprep.subr.bf16.mxu0 0
        %928 = vmatpush1.bf16.msra.mxu0 0
        %929 = vmatprep.subr.bf16.mxu0 0
        %930 = vmatpush1.bf16.msra.mxu0 0
        %931 = vmatprep.subr.bf16.mxu0 0
        %932 = vmatpush1.bf16.msra.mxu0 0
        %933 = vmatprep.mubr.bf16.mxu0 0
        %934 = vmatmul.mubr.bf16.gmra.mrb[0].mxu0 %v899
        %v935 = vpop.f32.mrb[0].mxu0
        %v936 = vadd.f32 0.0, %v935
        %v937 = vpop.f32.mrb[0].mxu0
        %v938 = vpop.f32.mrb[0].mxu0
        %v939 = vadd.f32 0.0, %v938
        %v940 = vpop.f32.mrb[0].mxu0
        %941 = vdwg.mxu0
        %v942 = vrcp.pop %v890
        %v943 = vrcp.pop %v893
        %v944 = vmul.f32 %v936, %v942
        %v945 = vmul.f32 %v939, %v943
        %v946 = vpack.c.bf16 %v945, %v944
        %948 = vrot.lane.b32.xlu0 %v946, 16
        %v949 = vpop.permute.xlu0 %948
        %vm951 = vcmask 195712
        %952 = vst.msk [vmem:[#allocation2] sm:$0xff] %vm951, %v949
        %s953 = sld [smem:[#allocation9 + $0x3]]
        %v954 = vstv %s953
        %v955 = vmul.f32 %v367, %v954
        %v956 = vmul.f32 %v368, %v954
        %957 = vrot.lane.b32.xlu0 %v358, 104
        %v958 = vpop.permute.xlu0 %957
        %959 = vrot.lane.b32.xlu0 %v358, 72
        %v960 = vpop.permute.xlu0 %959
        %v962 = vsel %vm424, %v958, 0
        %v965 = vsel %vm424, %v960, 0
        %967 = vmatprep.subr.bf16.mxu0 0
        %968 = vmatpush1.bf16.xpose.msra.mxu0 %v965
        %969 = vmatprep.subr.bf16.mxu0 0
        %970 = vmatpush1.bf16.xpose.msra.mxu0 0
        %971 = vmatprep.subr.bf16.mxu0 0
        %972 = vmatpush1.bf16.xpose.msra.mxu0 0
        %973 = vmatprep.subr.bf16.mxu0 0
        %974 = vmatpush1.bf16.xpose.msra.mxu0 0
        %975 = vmatprep.subr.bf16.mxu0 0
        %976 = vmatpush1.bf16.xpose.msra.mxu0 0
        %977 = vmatprep.subr.bf16.mxu0 0
        %978 = vmatpush1.bf16.xpose.msra.mxu0 0
        %979 = vmatprep.subr.bf16.mxu0 0
        %980 = vmatpush1.bf16.xpose.msra.mxu0 0
        %981 = vmatprep.subr.bf16.mxu0 0
        %982 = vmatpush1.bf16.xpose.msra.mxu0 0
        %983 = vmatprep.subr.bf16.mxu0 0
        %984 = vmatpush1.bf16.xpose.msra.mxu0 0
        %985 = vmatprep.subr.bf16.mxu0 0
        %986 = vmatpush1.bf16.xpose.msra.mxu0 0
        %987 = vmatprep.subr.bf16.mxu0 0
        %988 = vmatpush1.bf16.xpose.msra.mxu0 0
        %989 = vmatprep.subr.bf16.mxu0 0
        %990 = vmatpush1.bf16.xpose.msra.mxu0 0
        %991 = vmatprep.subr.bf16.mxu0 0
        %992 = vmatpush1.bf16.xpose.msra.mxu0 0
        %993 = vmatprep.subr.bf16.mxu0 0
        %994 = vmatpush1.bf16.xpose.msra.mxu0 0
        %995 = vmatprep.subr.bf16.mxu0 0
        %996 = vmatpush1.bf16.xpose.msra.mxu0 0
        %997 = vmatprep.subr.bf16.mxu0 0
        %998 = vmatpush1.bf16.xpose.msra.mxu0 0
        %999 = vmatprep.mubr.bf16.mxu0 0
        %1000 = vmatmul.mubr.bf16.gmra.mrb[0].mxu0 %v962
        %v1001 = vpop.f32.mrb[0].mxu0
        %v1002 = vadd.f32 %v955, %v1001
        %v1003 = vpop.f32.mrb[0].mxu0
        %v1004 = vpop.f32.mrb[0].mxu0
        %v1005 = vadd.f32 %v956, %v1004
        %v1006 = vpop.f32.mrb[0].mxu0
        %1007 = vdwg.mxu0
        %s1008 = sld [smem:[#allocation9 + $0x83]]
        %v1009 = vstv %s1008
        %v1010 = vmul.f32 %v373, %v1009
        %v1011 = vmul.f32 %v374, %v1009
        %v1012 = vadd.f32 %v1002, %v1010
        %v1013 = vadd.f32 %v1005, %v1011
        %s1014 = sld [smem:[#allocation9 + $0x103]]
        %v1015 = vstv %s1014
        %v1016 = vmul.f32 %v379, %v1015
        %v1017 = vmul.f32 %v380, %v1015
        %v1018 = vadd.f32 %v1012, %v1016
        %v1019 = vadd.f32 %v1013, %v1017
        %s1020 = sld [smem:[#allocation9 + $0x183]]
        %v1021 = vstv %s1020
        %v1022 = vmul.f32 %v385, %v1021
        %v1023 = vmul.f32 %v386, %v1021
        %v1024 = vadd.f32 %v1018, %v1022
        %v1025 = vadd.f32 %v1019, %v1023
        %s1026 = sld [smem:[#allocation9 + $0x203]]
        %v1027 = vstv %s1026
        %v1028 = vmul.f32 %v391, %v1027
        %v1029 = vmul.f32 %v392, %v1027
        %v1030 = vadd.f32 %v1024, %v1028
        %v1031 = vadd.f32 %v1025, %v1029
        %s1032 = sld [smem:[#allocation9 + $0x283]]
        %v1033 = vstv %s1032
        %v1034 = vmul.f32 %v397, %v1033
        %v1035 = vmul.f32 %v398, %v1033
        %v1036 = vadd.f32 %v1030, %v1034
        %v1037 = vadd.f32 %v1031, %v1035
        %s1038 = sld [smem:[#allocation9 + $0x303]]
        %v1039 = vstv %s1038
        %v1040 = vmul.f32 %v403, %v1039
        %v1041 = vmul.f32 %v404, %v1039
        %v1042 = vadd.f32 %v1036, %v1040
        %v1043 = vadd.f32 %v1037, %v1041
        %s1044 = sld [smem:[#allocation9 + $0x383]]
        %v1045 = vstv %s1044
        %v1046 = vmul.f32 %v409, %v1045
        %v1047 = vmul.f32 %v410, %v1045
        %v1048 = vadd.f32 %v1042, %v1046
        %v1049 = vadd.f32 %v1043, %v1047
        %s1050 = sld [smem:[#allocation9 + $0x403]]
        %v1051 = vstv %s1050
        %v1052 = vmul.f32 %v415, %v1051
        %v1053 = vmul.f32 %v416, %v1051
        %v1054 = vadd.f32 %v1048, %v1052
        %v1055 = vadd.f32 %v1049, %v1053
        %v1056 = vsel %vm520, %v1054, -inf
        %1057 = vmax.xlane.f32.xlu0 %v1056
        %v1058 = vpop.xlane.xlu0 %1057
        %v1059 = vsel %vm520, %v1055, -inf
        %1060 = vmax.xlane.f32.xlu0 %v1059
        %v1061 = vpop.xlane.xlu0 %1060
        %v1062 = vsub.f32 %v1054, %v1058
        %v1063 = vsub.f32 %v1055, %v1061
        %v1064 = vmul.f32 %v1062, 1.442695
        %v1065 = vpow.pop %v1064
        %v1066 = vmul.f32 %v1063, 1.442695
        %v1067 = vpow.pop %v1066
        %v1068 = vsel %vm520, %v1065, 0.0
        %1069 = vadd.xlane.f32.xlu0 %v1068
        %v1070 = vpop.xlane.xlu0 %1069
        %v1071 = vsel %vm520, %v1067, 0.0
        %1072 = vadd.xlane.f32.xlu0 %v1071
        %v1073 = vpop.xlane.xlu0 %1072
        %v1074 = vpack.c.bf16 %v1067, %v1065
        %1075 = vrot.lane.b32.xlu0 %v358, 40
        %v1076 = vpop.permute.xlu0 %1075
        %v1079 = vsel %vm520, %v1074, 0
        %1081 = vmatprep.subr.bf16.mxu0 0
        %1082 = vmatpush1.bf16.msra.mxu0 %v1076
        %1083 = vmatprep.subr.bf16.mxu0 0
        %1084 = vmatpush1.bf16.msra.mxu0 0
        %1085 = vmatprep.subr.bf16.mxu0 0
        %1086 = vmatpush1.bf16.msra.mxu0 0
        %1087 = vmatprep.subr.bf16.mxu0 0
        %1088 = vmatpush1.bf16.msra.mxu0 0
        %1089 = vmatprep.subr.bf16.mxu0 0
        %1090 = vmatpush1.bf16.msra.mxu0 0
        %1091 = vmatprep.subr.bf16.mxu0 0
        %1092 = vmatpush1.bf16.msra.mxu0 0
        %1093 = vmatprep.subr.bf16.mxu0 0
        %1094 = vmatpush1.bf16.msra.mxu0 0
        %1095 = vmatprep.subr.bf16.mxu0 0
        %1096 = vmatpush1.bf16.msra.mxu0 0
        %1097 = vmatprep.subr.bf16.mxu0 0
        %1098 = vmatpush1.bf16.msra.mxu0 0
        %1099 = vmatprep.subr.bf16.mxu0 0
        %1100 = vmatpush1.bf16.msra.mxu0 0
        %1101 = vmatprep.subr.bf16.mxu0 0
        %1102 = vmatpush1.bf16.msra.mxu0 0
        %1103 = vmatprep.subr.bf16.mxu0 0
        %1104 = vmatpush1.bf16.msra.mxu0 0
        %1105 = vmatprep.subr.bf16.mxu0 0
        %1106 = vmatpush1.bf16.msra.mxu0 0
        %1107 = vmatprep.subr.bf16.mxu0 0
        %1108 = vmatpush1.bf16.msra.mxu0 0
        %1109 = vmatprep.subr.bf16.mxu0 0
        %1110 = vmatpush1.bf16.msra.mxu0 0
        %1111 = vmatprep.subr.bf16.mxu0 0
        %1112 = vmatpush1.bf16.msra.mxu0 0
        %1113 = vmatprep.mubr.bf16.mxu0 0
        %1114 = vmatmul.mubr.bf16.gmra.mrb[0].mxu0 %v1079
        %v1115 = vpop.f32.mrb[0].mxu0
        %v1116 = vadd.f32 0.0, %v1115
        %v1117 = vpop.f32.mrb[0].mxu0
        %v1118 = vpop.f32.mrb[0].mxu0
        %v1119 = vadd.f32 0.0, %v1118
        %v1120 = vpop.f32.mrb[0].mxu0
        %1121 = vdwg.mxu0
        %v1122 = vrcp.pop %v1070
        %v1123 = vrcp.pop %v1073
        %v1124 = vmul.f32 %v1116, %v1122
        %v1125 = vmul.f32 %v1119, %v1123
        %v1126 = vpack.c.bf16 %v1125, %v1124
        %1128 = vrot.lane.b32.xlu0 %v1126, 24
        %v1129 = vpop.permute.xlu0 %1128
        %vm1131 = vcmask 261312
        %1132 = vst.msk [vmem:[#allocation2] sm:$0xff] %vm1131, %v1129
        %v1133 = vld [vmem:[#allocation2] sm:$0xff]
        %v1134 = vld [vmem:[#allocation7] sm:$0xf]
        %v1135 = vld [vmem:[#allocation7 + $0x4] sm:$0xf]
        %v1136 = vld [vmem:[#allocation7 + $0x8] sm:$0xf]
        %v1137 = vld [vmem:[#allocation7 + $0xc] sm:$0xf]
        %v1142 = vunpack.c.l.b16 %v1134
        %v1143 = vunpack.c.l.b16 %v1135
        %v1144 = vunpack.c.l.b16 %v1136
        %v1145 = vunpack.c.l.b16 %v1137
        %v1146 = vpack.c.b16 %v1143, %v1142
        %v1147 = vpack.c.b16 %v1145, %v1144
        %v1151 = vsel %vm313, %v1133, 0
        %1153 = vmatprep.subr.bf16.mxu0 0
        %1154 = vmatpush1.bf16.msra.mxu0 %v1146
        %1155 = vmatprep.subr.bf16.mxu0 0
        %1156 = vmatpush1.bf16.msra.mxu0 %v1147
        %1157 = vmatprep.subr.bf16.mxu0 0
        %1158 = vmatpush1.bf16.msra.mxu0 0
        %1159 = vmatprep.subr.bf16.mxu0 0
        %1160 = vmatpush1.bf16.msra.mxu0 0
        %1161 = vmatprep.subr.bf16.mxu0 0
        %1162 = vmatpush1.bf16.msra.mxu0 0
        %1163 = vmatprep.subr.bf16.mxu0 0
        %1164 = vmatpush1.bf16.msra.mxu0 0
        %1165 = vmatprep.subr.bf16.mxu0 0
        %1166 = vmatpush1.bf16.msra.mxu0 0
        %1167 = vmatprep.subr.bf16.mxu0 0
        %1168 = vmatpush1.bf16.msra.mxu0 0
        %1169 = vmatprep.subr.bf16.mxu0 0
        %1170 = vmatpush1.bf16.msra.mxu0 0
        %1171 = vmatprep.subr.bf16.mxu0 0
        %1172 = vmatpush1.bf16.msra.mxu0 0
        %1173 = vmatprep.subr.bf16.mxu0 0
        %1174 = vmatpush1.bf16.msra.mxu0 0
        %1175 = vmatprep.subr.bf16.mxu0 0
        %1176 = vmatpush1.bf16.msra.mxu0 0
        %1177 = vmatprep.subr.bf16.mxu0 0
        %1178 = vmatpush1.bf16.msra.mxu0 0
        %1179 = vmatprep.subr.bf16.mxu0 0
        %1180 = vmatpush1.bf16.msra.mxu0 0
        %1181 = vmatprep.subr.bf16.mxu0 0
        %1182 = vmatpush1.bf16.msra.mxu0 0
        %1183 = vmatprep.subr.bf16.mxu0 0
        %1184 = vmatpush1.bf16.msra.mxu0 0
        %1185 = vmatprep.mubr.bf16.mxu0 0
        %1186 = vmatmul.mubr.bf16.gmra.mrb[0].mxu0 %v1151
        %v1187 = vpop.f32.mrb[0].mxu0
        %v1188 = vadd.f32 0.0, %v1187
        %v1189 = vpop.f32.mrb[0].mxu0
        %v1190 = vpop.f32.mrb[0].mxu0
        %v1191 = vadd.f32 0.0, %v1190
        %v1192 = vpop.f32.mrb[0].mxu0
        %1193 = vdwg.mxu0
        %1194 = vst.msk [vmem:[%s278] sm:$0xff] %vm313, %v1188
        %1195 = vst.msk [vmem:[%s278 + $0x8] sm:$0xff] %vm313, %v1191
        %s1196 = sand.u32 %s145, 1
        %s1197 = scalar_lea.sflag [#allocation5], %s1196
        %s1198 = sand.u32 %s145, 1
        %s1199 = smul.addr %s1198, 16
        %s1200 = scalar_lea.vmem [#allocation10], %s1199
        // Predicated region
        $region53: #{tpu_custom_call.1} parent=39 // pred_check
          %p1201 = pneg %p155
        $region54: #{tpu_custom_call.1} parent=39 // pred_check_branch
          %1203 = sbr.rel (%p1201) target = $region56
        $region55: #{tpu_custom_call.1} parent=39 // pred_region
          %s1205 = ssub.s32 256, 256
          %1206 = vsyncadd %s1197, %s1205
          %s1207 = smul.addr %s22, 2
          %s1208 = smul.addr %s1207, 128
          %s1209 = scalar_lea.hbm %s5, %s1208
          %s1210 = sshll.u32 %s1200, 4
          %s1211 = int_to_ptr.vmem [resolvable:$true] %s1210
          %1216 = dma.vmem_to_hbm [thread:$0]  %s1211, 256, %s1209, %s1197, 128, 128, 8
        $region56: #{tpu_custom_call.1} parent=39 // pred_fallthru
          _
      $region40: #{tpu_custom_call.1} parent=5 // pred_fallthru
        _
      %p1217 = scmp.le.s32.totalorder 2, %s17
      // Predicated region
      $region57: #{tpu_custom_call.1} parent=5 // pred_check
        %p1218 = pneg %p1217
      $region58: #{tpu_custom_call.1} parent=5 // pred_check_branch
        %1220 = sbr.rel (%p1218) target = $region60
      $region59: #{tpu_custom_call.1} parent=5 // pred_region
        %s1221 = ssub.s32 %s17, 2
        // Predicated region
        $region61: #{tpu_custom_call.1} parent=59 // pred_check
          %p1222 = pneg %p161
        $region62: #{tpu_custom_call.1} parent=59 // pred_check_branch
          %1224 = sbr.rel (%p1222) target = $region64
        $region63: #{tpu_custom_call.1} parent=59 // pred_region
          %s1225 = sand.u32 %s146, 1
          %s1226 = scalar_lea.sflag [#allocation5], %s1225
          %s1227 = sand.u32 %s146, 1
          %s1228 = smul.addr %s1227, 16
          %s1229 = scalar_lea.vmem [#allocation10], %s1228
          %1230 = dma.done %s1226, 256
        $region64: #{tpu_custom_call.1} parent=59 // pred_fallthru
          _
      $region60: #{tpu_custom_call.1} parent=5 // pred_fallthru
        _
    $region6: #{tpu_custom_call.1} parent=1 // loop_footer
      %s21 = sadd.s32 1, %s17
    $region7: #{tpu_custom_call.1} parent=1 // loop_footer_branch
      %16 = sbr.rel target = $region3
    $region8: #{tpu_custom_call.1} parent=1 // loop_exit
      _
    %1231 = vsyncpa [#allocation4], 1
    %s1232 = scalar_lea.sflag [#allocation4], 1
    %1233 = vsyncpa %s1232, 1
    %1234 = vsyncpa [#allocation8], 1
    %1235 = vsyncpa [#allocation5], 1
    %s1236 = scalar_lea.sflag [#allocation5], 1
    %1237 = vsyncpa %s1236, 1
    %1238 = vsyncpa [#allocation6], 1
    %s1239 = scalar_lea.sflag [#allocation6], 1
    %1240 = vsyncpa %s1239, 1

</llo_original>
